<compile_context>
chip_gen: v6e
topology: v6e:2x2x1
jax: 0.10.0
libtpu: 0.0.40
codegen_flags: <defaults>
</compile_context>

<pallas_src>
import numpy as np
import jax
import jax.numpy as jnp
from jax import lax
from jax.experimental import pallas as pl
from jax.experimental.pallas import tpu as pltpu

_LANES = 128      # lane width -> last-dim padding target of the packed slab
_SUBLANES = 8     # slab sections are 8-row aligned so every view is aligned


def _pad_to(n, m):
    return -(-n // m) * m


# --------------------------------------------------------------------------- #
# Parameter packing: one lane-dense f32 slab holding every weight/bias.
# --------------------------------------------------------------------------- #
def pack_params(raw, input_dim, hidden_dim, output_dim, alength):
    D, H, O, A = input_dim, hidden_dim, output_dim, alength
    four_h = 4 * H
    assert four_h <= _LANES, "packing assumes 4*hidden_dim <= 128"

    # tanh-identity pre-scale: sigmoid(z) == 0.5*(1 + tanh(z/2)).  Bake the
    # 0.5 into the i/f/o gate columns of W_ih, W_hh and the bias; the g gate
    # (columns 2H:3H) stays unscaled because the cell needs tanh(z_g) directly.
    scale = np.ones((four_h,), np.float32)
    scale[0 * H:2 * H] = 0.5          # i, f gates
    scale[3 * H:4 * H] = 0.5          # o gate

    mats = {
        "w_ih":  np.asarray(raw["w_ih_t"], np.float32) * scale,   # (D, 4H)
        "w_hh":  np.asarray(raw["w_hh_t"], np.float32) * scale,   # (H, 4H)
        "b":     np.asarray(raw["b_lstm"], np.float32) * scale,   # (1, 4H)
        "w1":    np.asarray(raw["W1"], np.float32),               # (A, H)
        "w2":    np.asarray(raw["W2"], np.float32),               # (H, A)
        "w_out": np.asarray(raw["w_out_t"], np.float32),          # (H, O)
        "b_out": np.asarray(raw["b_out"], np.float32),            # (1, O)
    }
    offsets, rows = {}, 0
    for name, m in mats.items():
        offsets[name] = rows
        rows += _pad_to(m.shape[0], _SUBLANES)
    slab = np.zeros((rows, _LANES), np.float32)
    for name, m in mats.items():
        r = offsets[name]
        slab[r:r + m.shape[0], :m.shape[1]] = m
    layout = dict(D=D, H=H, O=O, A=A, offsets=offsets)
    return jnp.asarray(slab), layout


# --------------------------------------------------------------------------- #
# Fused kernel: LSTM recurrence (batch row -1) + self-attention + out Linear
# --------------------------------------------------------------------------- #
def _build_kernel(layout, T, B):
    D, H, O, A = layout["D"], layout["H"], layout["O"], layout["A"]
    off = layout["offsets"]
    four_h = 4 * H

    def kernel(slab_ref, x_ref, out_ref):
        # ---- parameter views carved from the single packed slab ------------ #
        w_ih = slab_ref[off["w_ih"]:off["w_ih"] + D, :four_h]     # (D, 4H)
        w_hh = slab_ref[off["w_hh"]:off["w_hh"] + H, :four_h]     # (H, 4H)
        b    = slab_ref[off["b"]:off["b"] + 1, :four_h]           # (1, 4H)

        # ---- in-kernel selection of lstm_output[:, -1, :]'s batch row ------ #
        # Only batch row B-1 feeds the attention; its recurrence is independent
        # of the other rows (h0 = c0 = 0).  Gather its T input rows as clean
        # (1, D) strided loads, then run one hoisted (T,D)@(D,4H) projection.
        x_rows = [x_ref[t, B - 1:B, :] for t in range(T)]         # T x (1, D)
        x_last = jnp.concatenate(x_rows, axis=0)                  # (T, D)
        gates_x = jnp.dot(x_last, w_ih,
                          preferred_element_type=jnp.float32) + b  # (T, 4H)

        # ---- LSTM recurrence, fully unrolled; history stays in vregs ------- #
        h = jnp.zeros((1, H), jnp.float32)
        c = jnp.zeros((1, H), jnp.float32)
        h_rows = []
        for t in range(T):   # static unroll == fori_loop(..., unroll=True)
            g_all = gates_x[t:t + 1, :] + jnp.dot(
                h, w_hh, preferred_element_type=jnp.float32)       # (1, 4H)
            tg = jnp.tanh(g_all)     # single EUP push; i/f/o pre-scaled by 0.5
            i_g = 0.5 * (tg[:, 0 * H:1 * H] + 1.0)   # sigmoid via tanh identity
            f_g = 0.5 * (tg[:, 1 * H:2 * H] + 1.0)
            g_g = tg[:, 2 * H:3 * H]                  # g gate: plain tanh
            o_g = 0.5 * (tg[:, 3 * H:4 * H] + 1.0)
            c = f_g * c + i_g * g_g
            h = o_g * jnp.tanh(c)
            h_rows.append(h)                          # vreg-resident history
        h_seq = jnp.concatenate(h_rows, axis=0)                   # (T, H)

        # ---- self-attention over the seq axis + output Linear -------------- #
        w1    = slab_ref[off["w1"]:off["w1"] + A, :H]             # (A, H)
        w2    = slab_ref[off["w2"]:off["w2"] + H, :A]             # (H, A)
        w_out = slab_ref[off["w_out"]:off["w_out"] + H, :O]       # (H, O)
        b_out = slab_ref[off["b_out"]:off["b_out"] + 1, :O]       # (1, O)

        # attention_score = tanh(W1 @ h_seq^T): single NT contraction.
        score = jnp.tanh(lax.dot_general(
            w1, h_seq, (((1,), (1,)), ((), ())),
            preferred_element_type=jnp.float32))                  # (A, T)
        logits = jnp.dot(w2, score,
                         preferred_element_type=jnp.float32)      # (H, T)
        logits = logits - jnp.max(logits, axis=1, keepdims=True)
        e = jnp.exp(logits)
        aw = e / jnp.sum(e, axis=1, keepdims=True)                # softmax over T
        emb = jnp.dot(aw, h_seq,
                      preferred_element_type=jnp.float32)         # (H, H)
        out_ref[...] = (jnp.dot(emb, w_out,
                                preferred_element_type=jnp.float32)
                        + b_out)                                  # (H, O)

    return kernel


def make_forward(layout):
    H, O = layout["H"], layout["O"]

    def forward(x, slab):
        T, B, _ = x.shape
        kernel = _build_kernel(layout, T=T, B=B)
        vmem = pl.BlockSpec(memory_space=pltpu.MemorySpace.VMEM)
        out = pl.pallas_call(
            kernel,
            out_shape=jax.ShapeDtypeStruct((H, O), jnp.float32),
            in_specs=[vmem, vmem],        # packed slab + full x: 2 DMAs total
            out_specs=vmem,
        )(slab, x)
        return out[None]                  # (1, H, O)  -- the unsqueeze(0)

    return forward


# --------------------------------------------------------------------------- #
# Init + pure-JAX reference mirroring the PyTorch forward
# --------------------------------------------------------------------------- #
def init_params(key, input_dim, hidden_dim, output_dim, alength):
    D, H, O, A = input_dim, hidden_dim, output_dim, alength
    ks = jax.random.split(key, 8)
    s = 1.0 / float(np.sqrt(H))
    w_ih = jax.random.uniform(ks[0], (4 * H, D), minval=-s, maxval=s)
    w_hh = jax.random.uniform(ks[1], (4 * H, H), minval=-s, maxval=s)
    b_ih = jax.random.uniform(ks[2], (4 * H,), minval=-s, maxval=s)
    b_hh = jax.random.uniform(ks[3], (4 * H,), minval=-s, maxval=s)
    W1 = jax.random.normal(ks[4], (A, H))
    W2 = jax.random.normal(ks[5], (H, A))
    w_out = jax.random.uniform(ks[6], (O, H), minval=-s, maxval=s)
    b_out = jax.random.uniform(ks[7], (O,), minval=-s, maxval=s)
    raw = dict(
        w_ih_t=w_ih.T.astype(jnp.float32),                        # (D, 4H)
        w_hh_t=w_hh.T.astype(jnp.float32),                        # (H, 4H)
        b_lstm=(b_ih + b_hh).reshape(1, -1).astype(jnp.float32),  # (1, 4H)
        W1=W1.astype(jnp.float32),                                # (A, H)
        W2=W2.astype(jnp.float32),                                # (H, A)
        w_out_t=w_out.T.astype(jnp.float32),                      # (H, O)
        b_out=b_out.reshape(1, -1).astype(jnp.float32),           # (1, O)
    )
    slab, layout = pack_params(raw, D, H, O, A)
    return raw, slab, layout


def reference_forward(x, p):
    """Pure-JAX reference mirroring the PyTorch forward (full-batch LSTM)."""
    T, B, _ = x.shape
    H = p["w_hh_t"].shape[0]
    h = jnp.zeros((B, H), jnp.float32)
    c = jnp.zeros((B, H), jnp.float32)
    outs = []
    for t in range(T):
        gates = x[t] @ p["w_ih_t"] + h @ p["w_hh_t"] + p["b_lstm"]
        i = jax.nn.sigmoid(gates[:, :H])
        f = jax.nn.sigmoid(gates[:, H:2 * H])
        g = jnp.tanh(gates[:, 2 * H:3 * H])
        o = jax.nn.sigmoid(gates[:, 3 * H:])
        c = f * c + i * g
        h = o * jnp.tanh(c)
        outs.append(h)
    lstm_out = jnp.stack(outs)                    # (T, B, H)
    hs = lstm_out[:, -1, :]                       # (T, H)  -- batch index -1
    score = jnp.tanh(p["W1"] @ hs.T)              # (A, T)
    aw = jax.nn.softmax(p["W2"] @ score, axis=1)  # (H, T)
    emb = aw @ hs                                 # (H, H)
    return (emb @ p["w_out_t"] + p["b_out"])[None]


# TODO(synk): the optional src_mask masked_fill branch is not implemented
# (the forward is exercised with src_mask=None, matching the default).

if __name__ == "__main__":
    input_dim, hidden_dim, output_dim, seq_length, alength, batch = 8, 32, 4, 8, 16, 2

    key = jax.random.PRNGKey(0)
    kx, kp = jax.random.split(key)
    x = jax.random.normal(kx, (seq_length, batch, input_dim), dtype=jnp.float32)
    raw, slab, layout = init_params(kp, input_dim, hidden_dim, output_dim, alength)

    fwd = jax.jit(make_forward(layout))
    out = jax.block_until_ready(fwd(x, slab))

    ref = reference_forward(x, raw)
    # Slightly relaxed vs 1e-4: the tanh-identity sigmoid is mathematically
    # exact but differs from jax.nn.sigmoid by a few ulps per step.
    np.testing.assert_allclose(np.asarray(out), np.asarray(ref), rtol=2e-4, atol=2e-4)
    assert out.shape == (1, hidden_dim, output_dim)

    print("KERNEL_OK")
</pallas_src>

<mosaic_0001>
module attributes {stable_mosaic.version = 11 : i64} {
  func.func @kernel(%arg0: memref<136x128xf32, #tpu.memory_space<vmem>>, %arg1: memref<8x2x8xf32, #tpu.memory_space<vmem>>, %arg2: memref<32x4xf32, #tpu.memory_space<vmem>>) attributes {dimension_semantics = [], scalar_prefetch = 0 : i64, scratch_operands = 0 : i64, tpu.core_type = #tpu.core_type<tc>} {
    %c0 = arith.constant 0 : index
    %c0_0 = arith.constant 0 : index
    %0 = vector.load %arg0[%c0, %c0_0] : memref<136x128xf32, #tpu.memory_space<vmem>>, vector<8x128xf32>
    %c8 = arith.constant 8 : index
    %c0_1 = arith.constant 0 : index
    %1 = vector.load %arg0[%c8, %c0_1] : memref<136x128xf32, #tpu.memory_space<vmem>>, vector<32x128xf32>
    %c40 = arith.constant 40 : index
    %c0_2 = arith.constant 0 : index
    %2 = vector.load %arg0[%c40, %c0_2] : memref<136x128xf32, #tpu.memory_space<vmem>>, vector<1x128xf32>
    %c0_3 = arith.constant 0 : index
    %c1 = arith.constant 1 : index
    %c0_4 = arith.constant 0 : index
    %3 = vector.load %arg1[%c0_3, %c1, %c0_4] : memref<8x2x8xf32, #tpu.memory_space<vmem>>, vector<1x1x8xf32>
    %4 = vector.shape_cast %3 : vector<1x1x8xf32> to vector<1x8xf32>
    %c1_5 = arith.constant 1 : index
    %c1_6 = arith.constant 1 : index
    %c0_7 = arith.constant 0 : index
    %5 = vector.load %arg1[%c1_5, %c1_6, %c0_7] : memref<8x2x8xf32, #tpu.memory_space<vmem>>, vector<1x1x8xf32>
    %6 = vector.shape_cast %5 : vector<1x1x8xf32> to vector<1x8xf32>
    %c2 = arith.constant 2 : index
    %c1_8 = arith.constant 1 : index
    %c0_9 = arith.constant 0 : index
    %7 = vector.load %arg1[%c2, %c1_8, %c0_9] : memref<8x2x8xf32, #tpu.memory_space<vmem>>, vector<1x1x8xf32>
    %8 = vector.shape_cast %7 : vector<1x1x8xf32> to vector<1x8xf32>
    %c3 = arith.constant 3 : index
    %c1_10 = arith.constant 1 : index
    %c0_11 = arith.constant 0 : index
    %9 = vector.load %arg1[%c3, %c1_10, %c0_11] : memref<8x2x8xf32, #tpu.memory_space<vmem>>, vector<1x1x8xf32>
    %10 = vector.shape_cast %9 : vector<1x1x8xf32> to vector<1x8xf32>
    %c4 = arith.constant 4 : index
    %c1_12 = arith.constant 1 : index
    %c0_13 = arith.constant 0 : index
    %11 = vector.load %arg1[%c4, %c1_12, %c0_13] : memref<8x2x8xf32, #tpu.memory_space<vmem>>, vector<1x1x8xf32>
    %12 = vector.shape_cast %11 : vector<1x1x8xf32> to vector<1x8xf32>
    %c5 = arith.constant 5 : index
    %c1_14 = arith.constant 1 : index
    %c0_15 = arith.constant 0 : index
    %13 = vector.load %arg1[%c5, %c1_14, %c0_15] : memref<8x2x8xf32, #tpu.memory_space<vmem>>, vector<1x1x8xf32>
    %14 = vector.shape_cast %13 : vector<1x1x8xf32> to vector<1x8xf32>
    %c6 = arith.constant 6 : index
    %c1_16 = arith.constant 1 : index
    %c0_17 = arith.constant 0 : index
    %15 = vector.load %arg1[%c6, %c1_16, %c0_17] : memref<8x2x8xf32, #tpu.memory_space<vmem>>, vector<1x1x8xf32>
    %16 = vector.shape_cast %15 : vector<1x1x8xf32> to vector<1x8xf32>
    %c7 = arith.constant 7 : index
    %c1_18 = arith.constant 1 : index
    %c0_19 = arith.constant 0 : index
    %17 = vector.load %arg1[%c7, %c1_18, %c0_19] : memref<8x2x8xf32, #tpu.memory_space<vmem>>, vector<1x1x8xf32>
    %18 = vector.shape_cast %17 : vector<1x1x8xf32> to vector<1x8xf32>
    %19 = tpu.concatenate %4, %6, %8, %10, %12, %14, %16, %18 in 0 : vector<1x8xf32>, vector<1x8xf32>, vector<1x8xf32>, vector<1x8xf32>, vector<1x8xf32>, vector<1x8xf32>, vector<1x8xf32>, vector<1x8xf32> -> vector<8x8xf32>
    %cst = arith.constant dense<0.000000e+00> : vector<8x128xf32>
    %20 = tpu.matmul %19, %0, %cst {dimension_numbers = #tpu.dot_dimension_numbers<[1], [0], [0], [1], [0, 0, 1, 1], [], []>} : vector<8x8xf32>, vector<8x128xf32>, vector<8x128xf32> -> vector<8x128xf32>
    %21 = vector.broadcast %2 : vector<1x128xf32> to vector<8x128xf32>
    %22 = arith.addf %20, %21 : vector<8x128xf32>
    %cst_20 = arith.constant 0.000000e+00 : f32
    %23 = vector.broadcast %cst_20 : f32 to vector<1x32xf32>
    %cst_21 = arith.constant 0.000000e+00 : f32
    %24 = vector.broadcast %cst_21 : f32 to vector<1x32xf32>
    %25 = vector.extract_strided_slice %22 {offsets = [0, 0], sizes = [1, 128], strides = [1, 1]} : vector<8x128xf32> to vector<1x128xf32>
    %cst_22 = arith.constant dense<0.000000e+00> : vector<1x128xf32>
    %26 = tpu.matmul %23, %1, %cst_22 {dimension_numbers = #tpu.dot_dimension_numbers<[1], [0], [0], [1], [0, 0, 1, 1], [], []>} : vector<1x32xf32>, vector<32x128xf32>, vector<1x128xf32> -> vector<1x128xf32>
    %27 = arith.addf %25, %26 : vector<1x128xf32>
    %28 = math.tanh %27 : vector<1x128xf32>
    %29 = vector.extract_strided_slice %28 {offsets = [0, 0], sizes = [1, 32], strides = [1, 1]} : vector<1x128xf32> to vector<1x32xf32>
    %cst_23 = arith.constant 1.000000e+00 : f32
    %30 = vector.broadcast %cst_23 : f32 to vector<1x32xf32>
    %31 = arith.addf %29, %30 : vector<1x32xf32>
    %cst_24 = arith.constant 5.000000e-01 : f32
    %32 = vector.broadcast %cst_24 : f32 to vector<1x32xf32>
    %33 = arith.mulf %32, %31 : vector<1x32xf32>
    %34 = vector.extract_strided_slice %28 {offsets = [0, 32], sizes = [1, 32], strides = [1, 1]} : vector<1x128xf32> to vector<1x32xf32>
    %cst_25 = arith.constant 1.000000e+00 : f32
    %35 = vector.broadcast %cst_25 : f32 to vector<1x32xf32>
    %36 = arith.addf %34, %35 : vector<1x32xf32>
    %cst_26 = arith.constant 5.000000e-01 : f32
    %37 = vector.broadcast %cst_26 : f32 to vector<1x32xf32>
    %38 = arith.mulf %37, %36 : vector<1x32xf32>
    %39 = vector.extract_strided_slice %28 {offsets = [0, 64], sizes = [1, 32], strides = [1, 1]} : vector<1x128xf32> to vector<1x32xf32>
    %40 = vector.extract_strided_slice %28 {offsets = [0, 96], sizes = [1, 32], strides = [1, 1]} : vector<1x128xf32> to vector<1x32xf32>
    %cst_27 = arith.constant 1.000000e+00 : f32
    %41 = vector.broadcast %cst_27 : f32 to vector<1x32xf32>
    %42 = arith.addf %40, %41 : vector<1x32xf32>
    %cst_28 = arith.constant 5.000000e-01 : f32
    %43 = vector.broadcast %cst_28 : f32 to vector<1x32xf32>
    %44 = arith.mulf %43, %42 : vector<1x32xf32>
    %45 = arith.mulf %38, %24 : vector<1x32xf32>
    %46 = arith.mulf %33, %39 : vector<1x32xf32>
    %47 = arith.addf %45, %46 : vector<1x32xf32>
    %48 = math.tanh %47 : vector<1x32xf32>
    %49 = arith.mulf %44, %48 : vector<1x32xf32>
    %50 = vector.extract_strided_slice %22 {offsets = [1, 0], sizes = [1, 128], strides = [1, 1]} : vector<8x128xf32> to vector<1x128xf32>
    %cst_29 = arith.constant dense<0.000000e+00> : vector<1x128xf32>
    %51 = tpu.matmul %49, %1, %cst_29 {dimension_numbers = #tpu.dot_dimension_numbers<[1], [0], [0], [1], [0, 0, 1, 1], [], []>} : vector<1x32xf32>, vector<32x128xf32>, vector<1x128xf32> -> vector<1x128xf32>
    %52 = arith.addf %50, %51 : vector<1x128xf32>
    %53 = math.tanh %52 : vector<1x128xf32>
    %54 = vector.extract_strided_slice %53 {offsets = [0, 0], sizes = [1, 32], strides = [1, 1]} : vector<1x128xf32> to vector<1x32xf32>
    %cst_30 = arith.constant 1.000000e+00 : f32
    %55 = vector.broadcast %cst_30 : f32 to vector<1x32xf32>
    %56 = arith.addf %54, %55 : vector<1x32xf32>
    %cst_31 = arith.constant 5.000000e-01 : f32
    %57 = vector.broadcast %cst_31 : f32 to vector<1x32xf32>
    %58 = arith.mulf %57, %56 : vector<1x32xf32>
    %59 = vector.extract_strided_slice %53 {offsets = [0, 32], sizes = [1, 32], strides = [1, 1]} : vector<1x128xf32> to vector<1x32xf32>
    %cst_32 = arith.constant 1.000000e+00 : f32
    %60 = vector.broadcast %cst_32 : f32 to vector<1x32xf32>
    %61 = arith.addf %59, %60 : vector<1x32xf32>
    %cst_33 = arith.constant 5.000000e-01 : f32
    %62 = vector.broadcast %cst_33 : f32 to vector<1x32xf32>
    %63 = arith.mulf %62, %61 : vector<1x32xf32>
    %64 = vector.extract_strided_slice %53 {offsets = [0, 64], sizes = [1, 32], strides = [1, 1]} : vector<1x128xf32> to vector<1x32xf32>
    %65 = vector.extract_strided_slice %53 {offsets = [0, 96], sizes = [1, 32], strides = [1, 1]} : vector<1x128xf32> to vector<1x32xf32>
    %cst_34 = arith.constant 1.000000e+00 : f32
    %66 = vector.broadcast %cst_34 : f32 to vector<1x32xf32>
    %67 = arith.addf %65, %66 : vector<1x32xf32>
    %cst_35 = arith.constant 5.000000e-01 : f32
    %68 = vector.broadcast %cst_35 : f32 to vector<1x32xf32>
    %69 = arith.mulf %68, %67 : vector<1x32xf32>
    %70 = arith.mulf %63, %47 : vector<1x32xf32>
    %71 = arith.mulf %58, %64 : vector<1x32xf32>
    %72 = arith.addf %70, %71 : vector<1x32xf32>
    %73 = math.tanh %72 : vector<1x32xf32>
    %74 = arith.mulf %69, %73 : vector<1x32xf32>
    %75 = vector.extract_strided_slice %22 {offsets = [2, 0], sizes = [1, 128], strides = [1, 1]} : vector<8x128xf32> to vector<1x128xf32>
    %cst_36 = arith.constant dense<0.000000e+00> : vector<1x128xf32>
    %76 = tpu.matmul %74, %1, %cst_36 {dimension_numbers = #tpu.dot_dimension_numbers<[1], [0], [0], [1], [0, 0, 1, 1], [], []>} : vector<1x32xf32>, vector<32x128xf32>, vector<1x128xf32> -> vector<1x128xf32>
    %77 = arith.addf %75, %76 : vector<1x128xf32>
    %78 = math.tanh %77 : vector<1x128xf32>
    %79 = vector.extract_strided_slice %78 {offsets = [0, 0], sizes = [1, 32], strides = [1, 1]} : vector<1x128xf32> to vector<1x32xf32>
    %cst_37 = arith.constant 1.000000e+00 : f32
    %80 = vector.broadcast %cst_37 : f32 to vector<1x32xf32>
    %81 = arith.addf %79, %80 : vector<1x32xf32>
    %cst_38 = arith.constant 5.000000e-01 : f32
    %82 = vector.broadcast %cst_38 : f32 to vector<1x32xf32>
    %83 = arith.mulf %82, %81 : vector<1x32xf32>
    %84 = vector.extract_strided_slice %78 {offsets = [0, 32], sizes = [1, 32], strides = [1, 1]} : vector<1x128xf32> to vector<1x32xf32>
    %cst_39 = arith.constant 1.000000e+00 : f32
    %85 = vector.broadcast %cst_39 : f32 to vector<1x32xf32>
    %86 = arith.addf %84, %85 : vector<1x32xf32>
    %cst_40 = arith.constant 5.000000e-01 : f32
    %87 = vector.broadcast %cst_40 : f32 to vector<1x32xf32>
    %88 = arith.mulf %87, %86 : vector<1x32xf32>
    %89 = vector.extract_strided_slice %78 {offsets = [0, 64], sizes = [1, 32], strides = [1, 1]} : vector<1x128xf32> to vector<1x32xf32>
    %90 = vector.extract_strided_slice %78 {offsets = [0, 96], sizes = [1, 32], strides = [1, 1]} : vector<1x128xf32> to vector<1x32xf32>
    %cst_41 = arith.constant 1.000000e+00 : f32
    %91 = vector.broadcast %cst_41 : f32 to vector<1x32xf32>
    %92 = arith.addf %90, %91 : vector<1x32xf32>
    %cst_42 = arith.constant 5.000000e-01 : f32
    %93 = vector.broadcast %cst_42 : f32 to vector<1x32xf32>
    %94 = arith.mulf %93, %92 : vector<1x32xf32>
    %95 = arith.mulf %88, %72 : vector<1x32xf32>
    %96 = arith.mulf %83, %89 : vector<1x32xf32>
    %97 = arith.addf %95, %96 : vector<1x32xf32>
    %98 = math.tanh %97 : vector<1x32xf32>
    %99 = arith.mulf %94, %98 : vector<1x32xf32>
    %100 = vector.extract_strided_slice %22 {offsets = [3, 0], sizes = [1, 128], strides = [1, 1]} : vector<8x128xf32> to vector<1x128xf32>
    %cst_43 = arith.constant dense<0.000000e+00> : vector<1x128xf32>
    %101 = tpu.matmul %99, %1, %cst_43 {dimension_numbers = #tpu.dot_dimension_numbers<[1], [0], [0], [1], [0, 0, 1, 1], [], []>} : vector<1x32xf32>, vector<32x128xf32>, vector<1x128xf32> -> vector<1x128xf32>
    %102 = arith.addf %100, %101 : vector<1x128xf32>
    %103 = math.tanh %102 : vector<1x128xf32>
    %104 = vector.extract_strided_slice %103 {offsets = [0, 0], sizes = [1, 32], strides = [1, 1]} : vector<1x128xf32> to vector<1x32xf32>
    %cst_44 = arith.constant 1.000000e+00 : f32
    %105 = vector.broadcast %cst_44 : f32 to vector<1x32xf32>
    %106 = arith.addf %104, %105 : vector<1x32xf32>
    %cst_45 = arith.constant 5.000000e-01 : f32
    %107 = vector.broadcast %cst_45 : f32 to vector<1x32xf32>
    %108 = arith.mulf %107, %106 : vector<1x32xf32>
    %109 = vector.extract_strided_slice %103 {offsets = [0, 32], sizes = [1, 32], strides = [1, 1]} : vector<1x128xf32> to vector<1x32xf32>
    %cst_46 = arith.constant 1.000000e+00 : f32
    %110 = vector.broadcast %cst_46 : f32 to vector<1x32xf32>
    %111 = arith.addf %109, %110 : vector<1x32xf32>
    %cst_47 = arith.constant 5.000000e-01 : f32
    %112 = vector.broadcast %cst_47 : f32 to vector<1x32xf32>
    %113 = arith.mulf %112, %111 : vector<1x32xf32>
    %114 = vector.extract_strided_slice %103 {offsets = [0, 64], sizes = [1, 32], strides = [1, 1]} : vector<1x128xf32> to vector<1x32xf32>
    %115 = vector.extract_strided_slice %103 {offsets = [0, 96], sizes = [1, 32], strides = [1, 1]} : vector<1x128xf32> to vector<1x32xf32>
    %cst_48 = arith.constant 1.000000e+00 : f32
    %116 = vector.broadcast %cst_48 : f32 to vector<1x32xf32>
    %117 = arith.addf %115, %116 : vector<1x32xf32>
    %cst_49 = arith.constant 5.000000e-01 : f32
    %118 = vector.broadcast %cst_49 : f32 to vector<1x32xf32>
    %119 = arith.mulf %118, %117 : vector<1x32xf32>
    %120 = arith.mulf %113, %97 : vector<1x32xf32>
    %121 = arith.mulf %108, %114 : vector<1x32xf32>
    %122 = arith.addf %120, %121 : vector<1x32xf32>
    %123 = math.tanh %122 : vector<1x32xf32>
    %124 = arith.mulf %119, %123 : vector<1x32xf32>
    %125 = vector.extract_strided_slice %22 {offsets = [4, 0], sizes = [1, 128], strides = [1, 1]} : vector<8x128xf32> to vector<1x128xf32>
    %cst_50 = arith.constant dense<0.000000e+00> : vector<1x128xf32>
    %126 = tpu.matmul %124, %1, %cst_50 {dimension_numbers = #tpu.dot_dimension_numbers<[1], [0], [0], [1], [0, 0, 1, 1], [], []>} : vector<1x32xf32>, vector<32x128xf32>, vector<1x128xf32> -> vector<1x128xf32>
    %127 = arith.addf %125, %126 : vector<1x128xf32>
    %128 = math.tanh %127 : vector<1x128xf32>
    %129 = vector.extract_strided_slice %128 {offsets = [0, 0], sizes = [1, 32], strides = [1, 1]} : vector<1x128xf32> to vector<1x32xf32>
    %cst_51 = arith.constant 1.000000e+00 : f32
    %130 = vector.broadcast %cst_51 : f32 to vector<1x32xf32>
    %131 = arith.addf %129, %130 : vector<1x32xf32>
    %cst_52 = arith.constant 5.000000e-01 : f32
    %132 = vector.broadcast %cst_52 : f32 to vector<1x32xf32>
    %133 = arith.mulf %132, %131 : vector<1x32xf32>
    %134 = vector.extract_strided_slice %128 {offsets = [0, 32], sizes = [1, 32], strides = [1, 1]} : vector<1x128xf32> to vector<1x32xf32>
    %cst_53 = arith.constant 1.000000e+00 : f32
    %135 = vector.broadcast %cst_53 : f32 to vector<1x32xf32>
    %136 = arith.addf %134, %135 : vector<1x32xf32>
    %cst_54 = arith.constant 5.000000e-01 : f32
    %137 = vector.broadcast %cst_54 : f32 to vector<1x32xf32>
    %138 = arith.mulf %137, %136 : vector<1x32xf32>
    %139 = vector.extract_strided_slice %128 {offsets = [0, 64], sizes = [1, 32], strides = [1, 1]} : vector<1x128xf32> to vector<1x32xf32>
    %140 = vector.extract_strided_slice %128 {offsets = [0, 96], sizes = [1, 32], strides = [1, 1]} : vector<1x128xf32> to vector<1x32xf32>
    %cst_55 = arith.constant 1.000000e+00 : f32
    %141 = vector.broadcast %cst_55 : f32 to vector<1x32xf32>
    %142 = arith.addf %140, %141 : vector<1x32xf32>
    %cst_56 = arith.constant 5.000000e-01 : f32
    %143 = vector.broadcast %cst_56 : f32 to vector<1x32xf32>
    %144 = arith.mulf %143, %142 : vector<1x32xf32>
    %145 = arith.mulf %138, %122 : vector<1x32xf32>
    %146 = arith.mulf %133, %139 : vector<1x32xf32>
    %147 = arith.addf %145, %146 : vector<1x32xf32>
    %148 = math.tanh %147 : vector<1x32xf32>
    %149 = arith.mulf %144, %148 : vector<1x32xf32>
    %150 = vector.extract_strided_slice %22 {offsets = [5, 0], sizes = [1, 128], strides = [1, 1]} : vector<8x128xf32> to vector<1x128xf32>
    %cst_57 = arith.constant dense<0.000000e+00> : vector<1x128xf32>
    %151 = tpu.matmul %149, %1, %cst_57 {dimension_numbers = #tpu.dot_dimension_numbers<[1], [0], [0], [1], [0, 0, 1, 1], [], []>} : vector<1x32xf32>, vector<32x128xf32>, vector<1x128xf32> -> vector<1x128xf32>
    %152 = arith.addf %150, %151 : vector<1x128xf32>
    %153 = math.tanh %152 : vector<1x128xf32>
    %154 = vector.extract_strided_slice %153 {offsets = [0, 0], sizes = [1, 32], strides = [1, 1]} : vector<1x128xf32> to vector<1x32xf32>
    %cst_58 = arith.constant 1.000000e+00 : f32
    %155 = vector.broadcast %cst_58 : f32 to vector<1x32xf32>
    %156 = arith.addf %154, %155 : vector<1x32xf32>
    %cst_59 = arith.constant 5.000000e-01 : f32
    %157 = vector.broadcast %cst_59 : f32 to vector<1x32xf32>
    %158 = arith.mulf %157, %156 : vector<1x32xf32>
    %159 = vector.extract_strided_slice %153 {offsets = [0, 32], sizes = [1, 32], strides = [1, 1]} : vector<1x128xf32> to vector<1x32xf32>
    %cst_60 = arith.constant 1.000000e+00 : f32
    %160 = vector.broadcast %cst_60 : f32 to vector<1x32xf32>
    %161 = arith.addf %159, %160 : vector<1x32xf32>
    %cst_61 = arith.constant 5.000000e-01 : f32
    %162 = vector.broadcast %cst_61 : f32 to vector<1x32xf32>
    %163 = arith.mulf %162, %161 : vector<1x32xf32>
    %164 = vector.extract_strided_slice %153 {offsets = [0, 64], sizes = [1, 32], strides = [1, 1]} : vector<1x128xf32> to vector<1x32xf32>
    %165 = vector.extract_strided_slice %153 {offsets = [0, 96], sizes = [1, 32], strides = [1, 1]} : vector<1x128xf32> to vector<1x32xf32>
    %cst_62 = arith.constant 1.000000e+00 : f32
    %166 = vector.broadcast %cst_62 : f32 to vector<1x32xf32>
    %167 = arith.addf %165, %166 : vector<1x32xf32>
    %cst_63 = arith.constant 5.000000e-01 : f32
    %168 = vector.broadcast %cst_63 : f32 to vector<1x32xf32>
    %169 = arith.mulf %168, %167 : vector<1x32xf32>
    %170 = arith.mulf %163, %147 : vector<1x32xf32>
    %171 = arith.mulf %158, %164 : vector<1x32xf32>
    %172 = arith.addf %170, %171 : vector<1x32xf32>
    %173 = math.tanh %172 : vector<1x32xf32>
    %174 = arith.mulf %169, %173 : vector<1x32xf32>
    %175 = vector.extract_strided_slice %22 {offsets = [6, 0], sizes = [1, 128], strides = [1, 1]} : vector<8x128xf32> to vector<1x128xf32>
    %cst_64 = arith.constant dense<0.000000e+00> : vector<1x128xf32>
    %176 = tpu.matmul %174, %1, %cst_64 {dimension_numbers = #tpu.dot_dimension_numbers<[1], [0], [0], [1], [0, 0, 1, 1], [], []>} : vector<1x32xf32>, vector<32x128xf32>, vector<1x128xf32> -> vector<1x128xf32>
    %177 = arith.addf %175, %176 : vector<1x128xf32>
    %178 = math.tanh %177 : vector<1x128xf32>
    %179 = vector.extract_strided_slice %178 {offsets = [0, 0], sizes = [1, 32], strides = [1, 1]} : vector<1x128xf32> to vector<1x32xf32>
    %cst_65 = arith.constant 1.000000e+00 : f32
    %180 = vector.broadcast %cst_65 : f32 to vector<1x32xf32>
    %181 = arith.addf %179, %180 : vector<1x32xf32>
    %cst_66 = arith.constant 5.000000e-01 : f32
    %182 = vector.broadcast %cst_66 : f32 to vector<1x32xf32>
    %183 = arith.mulf %182, %181 : vector<1x32xf32>
    %184 = vector.extract_strided_slice %178 {offsets = [0, 32], sizes = [1, 32], strides = [1, 1]} : vector<1x128xf32> to vector<1x32xf32>
    %cst_67 = arith.constant 1.000000e+00 : f32
    %185 = vector.broadcast %cst_67 : f32 to vector<1x32xf32>
    %186 = arith.addf %184, %185 : vector<1x32xf32>
    %cst_68 = arith.constant 5.000000e-01 : f32
    %187 = vector.broadcast %cst_68 : f32 to vector<1x32xf32>
    %188 = arith.mulf %187, %186 : vector<1x32xf32>
    %189 = vector.extract_strided_slice %178 {offsets = [0, 64], sizes = [1, 32], strides = [1, 1]} : vector<1x128xf32> to vector<1x32xf32>
    %190 = vector.extract_strided_slice %178 {offsets = [0, 96], sizes = [1, 32], strides = [1, 1]} : vector<1x128xf32> to vector<1x32xf32>
    %cst_69 = arith.constant 1.000000e+00 : f32
    %191 = vector.broadcast %cst_69 : f32 to vector<1x32xf32>
    %192 = arith.addf %190, %191 : vector<1x32xf32>
    %cst_70 = arith.constant 5.000000e-01 : f32
    %193 = vector.broadcast %cst_70 : f32 to vector<1x32xf32>
    %194 = arith.mulf %193, %192 : vector<1x32xf32>
    %195 = arith.mulf %188, %172 : vector<1x32xf32>
    %196 = arith.mulf %183, %189 : vector<1x32xf32>
    %197 = arith.addf %195, %196 : vector<1x32xf32>
    %198 = math.tanh %197 : vector<1x32xf32>
    %199 = arith.mulf %194, %198 : vector<1x32xf32>
    %200 = vector.extract_strided_slice %22 {offsets = [7, 0], sizes = [1, 128], strides = [1, 1]} : vector<8x128xf32> to vector<1x128xf32>
    %cst_71 = arith.constant dense<0.000000e+00> : vector<1x128xf32>
    %201 = tpu.matmul %199, %1, %cst_71 {dimension_numbers = #tpu.dot_dimension_numbers<[1], [0], [0], [1], [0, 0, 1, 1], [], []>} : vector<1x32xf32>, vector<32x128xf32>, vector<1x128xf32> -> vector<1x128xf32>
    %202 = arith.addf %200, %201 : vector<1x128xf32>
    %203 = math.tanh %202 : vector<1x128xf32>
    %204 = vector.extract_strided_slice %203 {offsets = [0, 0], sizes = [1, 32], strides = [1, 1]} : vector<1x128xf32> to vector<1x32xf32>
    %cst_72 = arith.constant 1.000000e+00 : f32
    %205 = vector.broadcast %cst_72 : f32 to vector<1x32xf32>
    %206 = arith.addf %204, %205 : vector<1x32xf32>
    %cst_73 = arith.constant 5.000000e-01 : f32
    %207 = vector.broadcast %cst_73 : f32 to vector<1x32xf32>
    %208 = arith.mulf %207, %206 : vector<1x32xf32>
    %209 = vector.extract_strided_slice %203 {offsets = [0, 32], sizes = [1, 32], strides = [1, 1]} : vector<1x128xf32> to vector<1x32xf32>
    %cst_74 = arith.constant 1.000000e+00 : f32
    %210 = vector.broadcast %cst_74 : f32 to vector<1x32xf32>
    %211 = arith.addf %209, %210 : vector<1x32xf32>
    %cst_75 = arith.constant 5.000000e-01 : f32
    %212 = vector.broadcast %cst_75 : f32 to vector<1x32xf32>
    %213 = arith.mulf %212, %211 : vector<1x32xf32>
    %214 = vector.extract_strided_slice %203 {offsets = [0, 64], sizes = [1, 32], strides = [1, 1]} : vector<1x128xf32> to vector<1x32xf32>
    %215 = vector.extract_strided_slice %203 {offsets = [0, 96], sizes = [1, 32], strides = [1, 1]} : vector<1x128xf32> to vector<1x32xf32>
    %cst_76 = arith.constant 1.000000e+00 : f32
    %216 = vector.broadcast %cst_76 : f32 to vector<1x32xf32>
    %217 = arith.addf %215, %216 : vector<1x32xf32>
    %cst_77 = arith.constant 5.000000e-01 : f32
    %218 = vector.broadcast %cst_77 : f32 to vector<1x32xf32>
    %219 = arith.mulf %218, %217 : vector<1x32xf32>
    %220 = arith.mulf %213, %197 : vector<1x32xf32>
    %221 = arith.mulf %208, %214 : vector<1x32xf32>
    %222 = arith.addf %220, %221 : vector<1x32xf32>
    %223 = math.tanh %222 : vector<1x32xf32>
    %224 = arith.mulf %219, %223 : vector<1x32xf32>
    %225 = tpu.concatenate %49, %74, %99, %124, %149, %174, %199, %224 in 0 : vector<1x32xf32>, vector<1x32xf32>, vector<1x32xf32>, vector<1x32xf32>, vector<1x32xf32>, vector<1x32xf32>, vector<1x32xf32>, vector<1x32xf32> -> vector<8x32xf32>
    %c48 = arith.constant 48 : index
    %c0_78 = arith.constant 0 : index
    %226 = vector.load %arg0[%c48, %c0_78] : memref<136x128xf32, #tpu.memory_space<vmem>>, vector<16x32xf32>
    %c64 = arith.constant 64 : index
    %c0_79 = arith.constant 0 : index
    %227 = vector.load %arg0[%c64, %c0_79] : memref<136x128xf32, #tpu.memory_space<vmem>>, vector<32x16xf32>
    %c96 = arith.constant 96 : index
    %c0_80 = arith.constant 0 : index
    %228 = vector.load %arg0[%c96, %c0_80] : memref<136x128xf32, #tpu.memory_space<vmem>>, vector<32x4xf32>
    %c128 = arith.constant 128 : index
    %c0_81 = arith.constant 0 : index
    %229 = vector.load %arg0[%c128, %c0_81] : memref<136x128xf32, #tpu.memory_space<vmem>>, vector<1x4xf32>
    %cst_82 = arith.constant dense<0.000000e+00> : vector<16x8xf32>
    %230 = tpu.matmul %226, %225, %cst_82 {dimension_numbers = #tpu.dot_dimension_numbers<[1], [1], [0], [0], [0, 0, 1, 0], [], []>} : vector<16x32xf32>, vector<8x32xf32>, vector<16x8xf32> -> vector<16x8xf32>
    %231 = math.tanh %230 : vector<16x8xf32>
    %cst_83 = arith.constant dense<0.000000e+00> : vector<32x8xf32>
    %232 = tpu.matmul %227, %231, %cst_83 {dimension_numbers = #tpu.dot_dimension_numbers<[1], [0], [0], [1], [0, 0, 1, 1], [], []>} : vector<32x16xf32>, vector<16x8xf32>, vector<32x8xf32> -> vector<32x8xf32>
    %cst_84 = arith.constant dense<0xFF800000> : vector<32xf32>
    %233 = vector.multi_reduction <maximumf>, %232, %cst_84 [1] : vector<32x8xf32> to vector<32xf32>
    %234 = vector.shape_cast %233 : vector<32xf32> to vector<32x1xf32>
    %235 = vector.broadcast %234 : vector<32x1xf32> to vector<32x8xf32>
    %236 = arith.subf %232, %235 : vector<32x8xf32>
    %237 = math.exp %236 : vector<32x8xf32>
    %cst_85 = arith.constant dense<0.000000e+00> : vector<32xf32>
    %238 = vector.multi_reduction <add>, %237, %cst_85 [1] : vector<32x8xf32> to vector<32xf32>
    %239 = vector.shape_cast %238 : vector<32xf32> to vector<32x1xf32>
    %240 = vector.broadcast %239 : vector<32x1xf32> to vector<32x8xf32>
    %241 = arith.divf %237, %240 : vector<32x8xf32>
    %cst_86 = arith.constant dense<0.000000e+00> : vector<32x32xf32>
    %242 = tpu.matmul %241, %225, %cst_86 {dimension_numbers = #tpu.dot_dimension_numbers<[1], [0], [0], [1], [0, 0, 1, 1], [], []>} : vector<32x8xf32>, vector<8x32xf32>, vector<32x32xf32> -> vector<32x32xf32>
    %cst_87 = arith.constant dense<0.000000e+00> : vector<32x4xf32>
    %243 = tpu.matmul %242, %228, %cst_87 {dimension_numbers = #tpu.dot_dimension_numbers<[1], [0], [0], [1], [0, 0, 1, 1], [], []>} : vector<32x32xf32>, vector<32x4xf32>, vector<32x4xf32> -> vector<32x4xf32>
    %244 = vector.broadcast %229 : vector<1x4xf32> to vector<32x4xf32>
    %245 = arith.addf %243, %244 : vector<32x4xf32>
    %c0_88 = arith.constant 0 : index
    %c0_89 = arith.constant 0 : index
    %246 = vector.load %arg2[%c0_88, %c0_89] : memref<32x4xf32, #tpu.memory_space<vmem>>, vector<32x4xf32>
    tpu.vector_store %arg2[%c0_88, %c0_89], %245 {strides = array<i32>} : memref<32x4xf32, #tpu.memory_space<vmem>>, vector<32x4xf32>,
    return
  }
}

</mosaic_0001>

<llo_original>
// kernel: forward.1
$region0: #{forward.1}
  #allocation0 [shape = 'u32[]', space=smem, size = 0x4, offset = 0x4, fixed_abs, tag = 'smem constant byte address 0x4 - core index']
  #allocation1 [shape = 'u32[144,128]{1,0:T(1,128)}', space=vmem, size = 0x12000, scoped, tag = 'internal scratch']
  %s0 = inlined_call_operand.hbm [shape: f32[136,128], index: 0, kind: input, shape index: {}]
  %s1 = inlined_call_operand.hbm [shape: f32[8,2,8], index: 1, kind: input, shape index: {}]
  %s2 = inlined_call_operand.vmem [shape: f32[32,4], index: 2, kind: output, shape index: {}]
  %s3 = sld [smem:[#allocation0]]
  $region26: #{forward.1} parent=0
    _
  %s5 = ssub.s32 1, %s3
  %s6 = scalar_select 0, %s5, %s3
  $region1: #{forward.1} parent=0
    #allocation2 [shape = 'u8[69632]{0}', space=vmem, size = 0x11000, scoped, tag = 'input window, operand 0, single buffered']
    #allocation3 [shape = 's32[1]{0}', space=sflag, size = 0x4, scoped, tag = 'scoped memory for forward.1']
    #allocation4 [shape = 'u8[8192]{0}', space=vmem, size = 0x2000, scoped, tag = 'input window, operand 1, single buffered']
    #allocation5 [shape = 's32[1]{0}', space=sflag, size = 0x4, scoped, tag = 'scoped memory for forward.1']
    %7 = vsyncpa [#allocation3], 0
    %8 = vsyncpa [#allocation5], 0
    // Predicated region
    $region2: #{forward.1} parent=1 // pred_check
      _
    $region3: #{forward.1} parent=1 // pred_check_branch
      %10 = sbr.rel (0) target = $region5
    $region4: #{forward.1} parent=1 // pred_region
      %s12 = ssub.s32 2176, 2176
      %13 = vsyncadd [#allocation3], %s12
      %s14 = sshll.u32 [#allocation2], 4
      %s15 = int_to_ptr.vmem [resolvable:$true] %s14
      %20 = dma.hbm_to_vmem [thread:$0]  %s0, 2176, %s15, [#allocation3], 128, 128, 8
    $region5: #{forward.1} parent=1 // pred_fallthru
      _
    // Predicated region
    $region6: #{forward.1} parent=1 // pred_check
      _
    $region7: #{forward.1} parent=1 // pred_check_branch
      %22 = sbr.rel (0) target = $region9
    $region8: #{forward.1} parent=1 // pred_region
      %s24 = ssub.s32 256, 256
      %25 = vsyncadd [#allocation5], %s24
      %s26 = sshll.u32 [#allocation4], 4
      %s27 = int_to_ptr.vmem [resolvable:$true] %s26
      %32 = dma.hbm_to_vmem [thread:$0]  %s1, 256, %s27, [#allocation5], 32, 32, 2
    $region9: #{forward.1} parent=1 // pred_fallthru
      _
    // Predicated region
    $region10: #{forward.1} parent=1 // pred_check
      _
    $region11: #{forward.1} parent=1 // pred_check_branch
      %34 = sbr.rel (0) target = $region13
    $region12: #{forward.1} parent=1 // pred_region
      %35 = dma.done [#allocation3], 2176
    $region13: #{forward.1} parent=1 // pred_fallthru
      _
    // Predicated region
    $region14: #{forward.1} parent=1 // pred_check
      _
    $region15: #{forward.1} parent=1 // pred_check_branch
      %37 = sbr.rel (0) target = $region17
    $region16: #{forward.1} parent=1 // pred_region
      %38 = dma.done [#allocation5], 256
    $region17: #{forward.1} parent=1 // pred_fallthru
      _
    %v39 = vld [vmem:[#allocation2] sm:$0xff]
    %v40 = vld [vmem:[#allocation2 + $0x8] sm:$0xff]
    %v41 = vld [vmem:[#allocation2 + $0x10] sm:$0xff]
    %v42 = vld [vmem:[#allocation2 + $0x18] sm:$0xff]
    %v43 = vld [vmem:[#allocation2 + $0x20] sm:$0xff]
    %v44 = vld [vmem:[#allocation2 + $0x28] sm:$0x1]
    %v45 = vld [vmem:[#allocation4 + $0x1] sm:$0x1]
    %s46 = scalar_lea.vmem [#allocation4], 2
    %v47 = vld [vmem:[%s46 + $0x1] sm:$0x1]
    %s48 = scalar_lea.vmem [#allocation4], 4
    %v49 = vld [vmem:[%s48 + $0x1] sm:$0x1]
    %s50 = scalar_lea.vmem [#allocation4], 6
    %v51 = vld [vmem:[%s50 + $0x1] sm:$0x1]
    %s52 = scalar_lea.vmem [#allocation4], 8
    %v53 = vld [vmem:[%s52 + $0x1] sm:$0x1]
    %s54 = scalar_lea.vmem [#allocation4], 10
    %v55 = vld [vmem:[%s54 + $0x1] sm:$0x1]
    %s56 = scalar_lea.vmem [#allocation4], 12
    %v57 = vld [vmem:[%s56 + $0x1] sm:$0x1]
    %s58 = scalar_lea.vmem [#allocation4], 14
    %v59 = vld [vmem:[%s58 + $0x1] sm:$0x1]
    %v61 = vrot.slane %v47, 7
    %v64 = vrot.slane %v49, 6
    %v67 = vrot.slane %v51, 5
    %v70 = vrot.slane %v53, 4
    %v73 = vrot.slane %v55, 3
    %v76 = vrot.slane %v57, 2
    %v79 = vrot.slane %v59, 1
    %vm81 = vcmask 1040384
    %v82 = vsel %vm81, %v45, %v61
    %vm83 = vcmask 1041408
    %v84 = vsel %vm83, %v82, %v64
    %vm85 = vcmask 1042432
    %v86 = vsel %vm85, %v84, %v67
    %vm87 = vcmask 1043456
    %v88 = vsel %vm87, %v86, %v70
    %vm89 = vcmask 1044480
    %v90 = vsel %vm89, %v88, %v73
    %vm91 = vcmask 1045504
    %v92 = vsel %vm91, %v90, %v76
    %vm93 = vcmask 1046528
    %v94 = vsel %vm93, %v92, %v79
    %v95 = vlaneseq
    %v96 = vshrl.u32 %v95, 7
    %v97 = vsub.s32 0, %v96
    %v98 = vrot.slane %v44, %v97
    %vm99 = vcmask 64512
    %v101 = vsel %vm99, %v94, 0
    %103 = vmatprep.subr.mxu0 0.0
    %104 = vmatpush1.msra.mxu0 0.0
    %105 = vmatprep.subr.mxu0 0.0
    %106 = vmatpush1.msra.mxu0 0.0
    %107 = vmatprep.subr.mxu0 0.0
    %108 = vmatpush1.msra.mxu0 0.0
    %109 = vmatprep.subr.mxu0 0.0
    %110 = vmatpush1.msra.mxu0 0.0
    %111 = vmatprep.subr.mxu0 0.0
    %112 = vmatpush1.msra.mxu0 0.0
    %113 = vmatprep.subr.mxu0 0.0
    %114 = vmatpush1.msra.mxu0 0.0
    %115 = vmatprep.subr.mxu0 0.0
    %116 = vmatpush1.msra.mxu0 0.0
    %117 = vmatprep.subr.mxu0 0.0
    %118 = vmatpush1.msra.mxu0 0.0
    %119 = vmatprep.subr.mxu0 0.0
    %120 = vmatpush1.msra.mxu0 0.0
    %121 = vmatprep.subr.mxu0 0.0
    %122 = vmatpush1.msra.mxu0 0.0
    %123 = vmatprep.subr.mxu0 0.0
    %124 = vmatpush1.msra.mxu0 0.0
    %125 = vmatprep.subr.mxu0 0.0
    %126 = vmatpush1.msra.mxu0 0.0
    %127 = vmatprep.subr.mxu0 0.0
    %128 = vmatpush1.msra.mxu0 0.0
    %129 = vmatprep.subr.mxu0 0.0
    %130 = vmatpush1.msra.mxu0 0.0
    %131 = vmatprep.subr.mxu0 0.0
    %132 = vmatpush1.msra.mxu0 0.0
    %133 = vmatprep.subr.mxu0 0.0
    %134 = vmatpush1.msra.mxu0 %v39
    %135 = vmatprep.subr.mxu0 0.0
    %136 = vmatpush2.msra.mxu0 0.0
    %137 = vmatprep.subr.mxu0 0.0
    %138 = vmatpush2.msra.mxu0 0.0
    %139 = vmatprep.subr.mxu0 0.0
    %140 = vmatpush2.msra.mxu0 0.0
    %141 = vmatprep.subr.mxu0 0.0
    %142 = vmatpush2.msra.mxu0 0.0
    %143 = vmatprep.subr.mxu0 0.0
    %144 = vmatpush2.msra.mxu0 0.0
    %145 = vmatprep.subr.mxu0 0.0
    %146 = vmatpush2.msra.mxu0 0.0
    %147 = vmatprep.subr.mxu0 0.0
    %148 = vmatpush2.msra.mxu0 0.0
    %149 = vmatprep.subr.mxu0 0.0
    %150 = vmatpush2.msra.mxu0 0.0
    %151 = vmatprep.subr.mxu0 0.0
    %152 = vmatpush2.msra.mxu0 0.0
    %153 = vmatprep.subr.mxu0 0.0
    %154 = vmatpush2.msra.mxu0 0.0
    %155 = vmatprep.subr.mxu0 0.0
    %156 = vmatpush2.msra.mxu0 0.0
    %157 = vmatprep.subr.mxu0 0.0
    %158 = vmatpush2.msra.mxu0 0.0
    %159 = vmatprep.subr.mxu0 0.0
    %160 = vmatpush2.msra.mxu0 0.0
    %161 = vmatprep.subr.mxu0 0.0
    %162 = vmatpush2.msra.mxu0 0.0
    %163 = vmatprep.subr.mxu0 0.0
    %164 = vmatpush2.msra.mxu0 0.0
    %165 = vmatprep.subr.mxu0 0.0
    %166 = vmatpush2.msra.mxu0 0.0
    %167 = vmatprep.mubr.f32.mxu0 0.0
    %168 = vmatmul.mubr.f32.gmra.mxu0 %v101
    %v169 = vpop.f32.mrf.mxu0
    %v170 = vadd.f32 %v98, %v169
    %v171 = vpop.f32.mrf.mxu0
    %172 = vdwg.mxu0
    %vm173 = vcmask 261120
    %v175 = vsel %vm173, 0.0, 0
    %177 = vmatprep.subr.mxu0 0.0
    %178 = vmatpush1.msra.mxu0 0.0
    %179 = vmatprep.subr.mxu0 0.0
    %180 = vmatpush1.msra.mxu0 0.0
    %181 = vmatprep.subr.mxu0 0.0
    %182 = vmatpush1.msra.mxu0 0.0
    %183 = vmatprep.subr.mxu0 0.0
    %184 = vmatpush1.msra.mxu0 0.0
    %185 = vmatprep.subr.mxu0 0.0
    %186 = vmatpush1.msra.mxu0 0.0
    %187 = vmatprep.subr.mxu0 0.0
    %188 = vmatpush1.msra.mxu0 0.0
    %189 = vmatprep.subr.mxu0 0.0
    %190 = vmatpush1.msra.mxu0 0.0
    %191 = vmatprep.subr.mxu0 0.0
    %192 = vmatpush1.msra.mxu0 0.0
    %193 = vmatprep.subr.mxu0 0.0
    %194 = vmatpush1.msra.mxu0 0.0
    %195 = vmatprep.subr.mxu0 0.0
    %196 = vmatpush1.msra.mxu0 0.0
    %197 = vmatprep.subr.mxu0 0.0
    %198 = vmatpush1.msra.mxu0 0.0
    %199 = vmatprep.subr.mxu0 0.0
    %200 = vmatpush1.msra.mxu0 0.0
    %201 = vmatprep.subr.mxu0 0.0
    %202 = vmatpush1.msra.mxu0 %v43
    %203 = vmatprep.subr.mxu0 0.0
    %204 = vmatpush1.msra.mxu0 %v42
    %205 = vmatprep.subr.mxu0 0.0
    %206 = vmatpush1.msra.mxu0 %v41
    %207 = vmatprep.subr.mxu0 0.0
    %208 = vmatpush1.msra.mxu0 %v40
    %209 = vmatprep.subr.mxu0 0.0
    %210 = vmatpush2.msra.mxu0 0.0
    %211 = vmatprep.subr.mxu0 0.0
    %212 = vmatpush2.msra.mxu0 0.0
    %213 = vmatprep.subr.mxu0 0.0
    %214 = vmatpush2.msra.mxu0 0.0
    %215 = vmatprep.subr.mxu0 0.0
    %216 = vmatpush2.msra.mxu0 0.0
    %217 = vmatprep.subr.mxu0 0.0
    %218 = vmatpush2.msra.mxu0 0.0
    %219 = vmatprep.subr.mxu0 0.0
    %220 = vmatpush2.msra.mxu0 0.0
    %221 = vmatprep.subr.mxu0 0.0
    %222 = vmatpush2.msra.mxu0 0.0
    %223 = vmatprep.subr.mxu0 0.0
    %224 = vmatpush2.msra.mxu0 0.0
    %225 = vmatprep.subr.mxu0 0.0
    %226 = vmatpush2.msra.mxu0 0.0
    %227 = vmatprep.subr.mxu0 0.0
    %228 = vmatpush2.msra.mxu0 0.0
    %229 = vmatprep.subr.mxu0 0.0
    %230 = vmatpush2.msra.mxu0 0.0
    %231 = vmatprep.subr.mxu0 0.0
    %232 = vmatpush2.msra.mxu0 0.0
    %233 = vmatprep.subr.mxu0 0.0
    %234 = vmatpush2.msra.mxu0 0.0
    %235 = vmatprep.subr.mxu0 0.0
    %236 = vmatpush2.msra.mxu0 0.0
    %237 = vmatprep.subr.mxu0 0.0
    %238 = vmatpush2.msra.mxu0 0.0
    %239 = vmatprep.subr.mxu0 0.0
    %240 = vmatpush2.msra.mxu0 0.0
    %241 = vmatprep.mubr.f32.mxu0 0.0
    %242 = vmatmul.mubr.f32.gmra.mxu0 %v175
    %v243 = vpop.f32.mrf.mxu0
    %v244 = vadd.f32 0.0, %v243
    %v245 = vpop.f32.mrf.mxu0
    %246 = vdwg.mxu0
    %v247 = vadd.f32 %v170, %v244
    %v248 = vtanh.pop %v247
    %v249 = vadd.f32 %v248, 1.0
    %v250 = vmul.f32 %v249, 0.5
    %v251 = vmul.f32 %v250, 0.0
    %253 = vrot.lane.b32.xlu0 %v248, 64
    %v254 = vpop.permute.xlu0 %253
    %v256 = vmul.f32 %v250, %v254
    %258 = vrot.lane.b32.xlu0 %v256, 32
    %v259 = vpop.permute.xlu0 %258
    %v261 = vadd.f32 %v251, %v259
    %v262 = vtanh.pop %v261
    %264 = vrot.lane.b32.xlu0 %v262, 64
    %v265 = vpop.permute.xlu0 %264
    %v267 = vmul.f32 %v250, %v265
    %269 = vrot.lane.b32.xlu0 %v267, 32
    %v270 = vpop.permute.xlu0 %269
    %v271 = vsel %vm173, %v270, 0
    %273 = vmatprep.subr.mxu0 0.0
    %274 = vmatpush1.msra.mxu0 0.0
    %275 = vmatprep.subr.mxu0 0.0
    %276 = vmatpush1.msra.mxu0 0.0
    %277 = vmatprep.subr.mxu0 0.0
    %278 = vmatpush1.msra.mxu0 0.0
    %279 = vmatprep.subr.mxu0 0.0
    %280 = vmatpush1.msra.mxu0 0.0
    %281 = vmatprep.subr.mxu0 0.0
    %282 = vmatpush1.msra.mxu0 0.0
    %283 = vmatprep.subr.mxu0 0.0
    %284 = vmatpush1.msra.mxu0 0.0
    %285 = vmatprep.subr.mxu0 0.0
    %286 = vmatpush1.msra.mxu0 0.0
    %287 = vmatprep.subr.mxu0 0.0
    %288 = vmatpush1.msra.mxu0 0.0
    %289 = vmatprep.subr.mxu0 0.0
    %290 = vmatpush1.msra.mxu0 0.0
    %291 = vmatprep.subr.mxu0 0.0
    %292 = vmatpush1.msra.mxu0 0.0
    %293 = vmatprep.subr.mxu0 0.0
    %294 = vmatpush1.msra.mxu0 0.0
    %295 = vmatprep.subr.mxu0 0.0
    %296 = vmatpush1.msra.mxu0 0.0
    %297 = vmatprep.subr.mxu0 0.0
    %298 = vmatpush1.msra.mxu0 %v43
    %299 = vmatprep.subr.mxu0 0.0
    %300 = vmatpush1.msra.mxu0 %v42
    %301 = vmatprep.subr.mxu0 0.0
    %302 = vmatpush1.msra.mxu0 %v41
    %303 = vmatprep.subr.mxu0 0.0
    %304 = vmatpush1.msra.mxu0 %v40
    %305 = vmatprep.subr.mxu0 0.0
    %306 = vmatpush2.msra.mxu0 0.0
    %307 = vmatprep.subr.mxu0 0.0
    %308 = vmatpush2.msra.mxu0 0.0
    %309 = vmatprep.subr.mxu0 0.0
    %310 = vmatpush2.msra.mxu0 0.0
    %311 = vmatprep.subr.mxu0 0.0
    %312 = vmatpush2.msra.mxu0 0.0
    %313 = vmatprep.subr.mxu0 0.0
    %314 = vmatpush2.msra.mxu0 0.0
    %315 = vmatprep.subr.mxu0 0.0
    %316 = vmatpush2.msra.mxu0 0.0
    %317 = vmatprep.subr.mxu0 0.0
    %318 = vmatpush2.msra.mxu0 0.0
    %319 = vmatprep.subr.mxu0 0.0
    %320 = vmatpush2.msra.mxu0 0.0
    %321 = vmatprep.subr.mxu0 0.0
    %322 = vmatpush2.msra.mxu0 0.0
    %323 = vmatprep.subr.mxu0 0.0
    %324 = vmatpush2.msra.mxu0 0.0
    %325 = vmatprep.subr.mxu0 0.0
    %326 = vmatpush2.msra.mxu0 0.0
    %327 = vmatprep.subr.mxu0 0.0
    %328 = vmatpush2.msra.mxu0 0.0
    %329 = vmatprep.subr.mxu0 0.0
    %330 = vmatpush2.msra.mxu0 0.0
    %331 = vmatprep.subr.mxu0 0.0
    %332 = vmatpush2.msra.mxu0 0.0
    %333 = vmatprep.subr.mxu0 0.0
    %334 = vmatpush2.msra.mxu0 0.0
    %335 = vmatprep.subr.mxu0 0.0
    %336 = vmatpush2.msra.mxu0 0.0
    %337 = vmatprep.mubr.f32.mxu0 0.0
    %338 = vmatmul.mubr.f32.gmra.mxu0 %v271
    %v339 = vpop.f32.mrf.mxu0
    %v340 = vadd.f32 0.0, %v339
    %v341 = vpop.f32.mrf.mxu0
    %342 = vdwg.mxu0
    %v344 = vrot.slane %v340, 7
    %v346 = vadd.f32 %v170, %v344
    %v347 = vtanh.pop %v346
    %v348 = vadd.f32 %v347, 1.0
    %v349 = vmul.f32 %v348, 0.5
    %v351 = vrot.slane %v261, 7
    %v353 = vmul.f32 %v349, %v351
    %355 = vrot.lane.b32.xlu0 %v347, 64
    %v356 = vpop.permute.xlu0 %355
    %v358 = vmul.f32 %v349, %v356
    %360 = vrot.lane.b32.xlu0 %v358, 32
    %v361 = vpop.permute.xlu0 %360
    %v363 = vadd.f32 %v353, %v361
    %v364 = vtanh.pop %v363
    %366 = vrot.lane.b32.xlu0 %v364, 64
    %v367 = vpop.permute.xlu0 %366
    %v369 = vmul.f32 %v349, %v367
    %v371 = vrot.slane %v369, 1
    %372 = vrot.lane.b32.xlu0 %v371, 32
    %v373 = vpop.permute.xlu0 %372
    %v374 = vsel %vm173, %v373, 0
    %376 = vmatprep.subr.mxu0 0.0
    %377 = vmatpush1.msra.mxu0 0.0
    %378 = vmatprep.subr.mxu0 0.0
    %379 = vmatpush1.msra.mxu0 0.0
    %380 = vmatprep.subr.mxu0 0.0
    %381 = vmatpush1.msra.mxu0 0.0
    %382 = vmatprep.subr.mxu0 0.0
    %383 = vmatpush1.msra.mxu0 0.0
    %384 = vmatprep.subr.mxu0 0.0
    %385 = vmatpush1.msra.mxu0 0.0
    %386 = vmatprep.subr.mxu0 0.0
    %387 = vmatpush1.msra.mxu0 0.0
    %388 = vmatprep.subr.mxu0 0.0
    %389 = vmatpush1.msra.mxu0 0.0
    %390 = vmatprep.subr.mxu0 0.0
    %391 = vmatpush1.msra.mxu0 0.0
    %392 = vmatprep.subr.mxu0 0.0
    %393 = vmatpush1.msra.mxu0 0.0
    %394 = vmatprep.subr.mxu0 0.0
    %395 = vmatpush1.msra.mxu0 0.0
    %396 = vmatprep.subr.mxu0 0.0
    %397 = vmatpush1.msra.mxu0 0.0
    %398 = vmatprep.subr.mxu0 0.0
    %399 = vmatpush1.msra.mxu0 0.0
    %400 = vmatprep.subr.mxu0 0.0
    %401 = vmatpush1.msra.mxu0 %v43
    %402 = vmatprep.subr.mxu0 0.0
    %403 = vmatpush1.msra.mxu0 %v42
    %404 = vmatprep.subr.mxu0 0.0
    %405 = vmatpush1.msra.mxu0 %v41
    %406 = vmatprep.subr.mxu0 0.0
    %407 = vmatpush1.msra.mxu0 %v40
    %408 = vmatprep.subr.mxu0 0.0
    %409 = vmatpush2.msra.mxu0 0.0
    %410 = vmatprep.subr.mxu0 0.0
    %411 = vmatpush2.msra.mxu0 0.0
    %412 = vmatprep.subr.mxu0 0.0
    %413 = vmatpush2.msra.mxu0 0.0
    %414 = vmatprep.subr.mxu0 0.0
    %415 = vmatpush2.msra.mxu0 0.0
    %416 = vmatprep.subr.mxu0 0.0
    %417 = vmatpush2.msra.mxu0 0.0
    %418 = vmatprep.subr.mxu0 0.0
    %419 = vmatpush2.msra.mxu0 0.0
    %420 = vmatprep.subr.mxu0 0.0
    %421 = vmatpush2.msra.mxu0 0.0
    %422 = vmatprep.subr.mxu0 0.0
    %423 = vmatpush2.msra.mxu0 0.0
    %424 = vmatprep.subr.mxu0 0.0
    %425 = vmatpush2.msra.mxu0 0.0
    %426 = vmatprep.subr.mxu0 0.0
    %427 = vmatpush2.msra.mxu0 0.0
    %428 = vmatprep.subr.mxu0 0.0
    %429 = vmatpush2.msra.mxu0 0.0
    %430 = vmatprep.subr.mxu0 0.0
    %431 = vmatpush2.msra.mxu0 0.0
    %432 = vmatprep.subr.mxu0 0.0
    %433 = vmatpush2.msra.mxu0 0.0
    %434 = vmatprep.subr.mxu0 0.0
    %435 = vmatpush2.msra.mxu0 0.0
    %436 = vmatprep.subr.mxu0 0.0
    %437 = vmatpush2.msra.mxu0 0.0
    %438 = vmatprep.subr.mxu0 0.0
    %439 = vmatpush2.msra.mxu0 0.0
    %440 = vmatprep.mubr.f32.mxu0 0.0
    %441 = vmatmul.mubr.f32.gmra.mxu0 %v374
    %v442 = vpop.f32.mrf.mxu0
    %v443 = vadd.f32 0.0, %v442
    %v444 = vpop.f32.mrf.mxu0
    %445 = vdwg.mxu0
    %v447 = vrot.slane %v443, 6
    %v449 = vadd.f32 %v170, %v447
    %v450 = vtanh.pop %v449
    %v451 = vadd.f32 %v450, 1.0
    %v452 = vmul.f32 %v451, 0.5
    %v454 = vrot.slane %v363, 7
    %v456 = vmul.f32 %v452, %v454
    %458 = vrot.lane.b32.xlu0 %v450, 64
    %v459 = vpop.permute.xlu0 %458
    %v461 = vmul.f32 %v452, %v459
    %463 = vrot.lane.b32.xlu0 %v461, 32
    %v464 = vpop.permute.xlu0 %463
    %v466 = vadd.f32 %v456, %v464
    %v467 = vtanh.pop %v466
    %469 = vrot.lane.b32.xlu0 %v467, 64
    %v470 = vpop.permute.xlu0 %469
    %v472 = vmul.f32 %v452, %v470
    %v474 = vrot.slane %v472, 2
    %475 = vrot.lane.b32.xlu0 %v474, 32
    %v476 = vpop.permute.xlu0 %475
    %v477 = vsel %vm173, %v476, 0
    %479 = vmatprep.subr.mxu0 0.0
    %480 = vmatpush1.msra.mxu0 0.0
    %481 = vmatprep.subr.mxu0 0.0
    %482 = vmatpush1.msra.mxu0 0.0
    %483 = vmatprep.subr.mxu0 0.0
    %484 = vmatpush1.msra.mxu0 0.0
    %485 = vmatprep.subr.mxu0 0.0
    %486 = vmatpush1.msra.mxu0 0.0
    %487 = vmatprep.subr.mxu0 0.0
    %488 = vmatpush1.msra.mxu0 0.0
    %489 = vmatprep.subr.mxu0 0.0
    %490 = vmatpush1.msra.mxu0 0.0
    %491 = vmatprep.subr.mxu0 0.0
    %492 = vmatpush1.msra.mxu0 0.0
    %493 = vmatprep.subr.mxu0 0.0
    %494 = vmatpush1.msra.mxu0 0.0
    %495 = vmatprep.subr.mxu0 0.0
    %496 = vmatpush1.msra.mxu0 0.0
    %497 = vmatprep.subr.mxu0 0.0
    %498 = vmatpush1.msra.mxu0 0.0
    %499 = vmatprep.subr.mxu0 0.0
    %500 = vmatpush1.msra.mxu0 0.0
    %501 = vmatprep.subr.mxu0 0.0
    %502 = vmatpush1.msra.mxu0 0.0
    %503 = vmatprep.subr.mxu0 0.0
    %504 = vmatpush1.msra.mxu0 %v43
    %505 = vmatprep.subr.mxu0 0.0
    %506 = vmatpush1.msra.mxu0 %v42
    %507 = vmatprep.subr.mxu0 0.0
    %508 = vmatpush1.msra.mxu0 %v41
    %509 = vmatprep.subr.mxu0 0.0
    %510 = vmatpush1.msra.mxu0 %v40
    %511 = vmatprep.subr.mxu0 0.0
    %512 = vmatpush2.msra.mxu0 0.0
    %513 = vmatprep.subr.mxu0 0.0
    %514 = vmatpush2.msra.mxu0 0.0
    %515 = vmatprep.subr.mxu0 0.0
    %516 = vmatpush2.msra.mxu0 0.0
    %517 = vmatprep.subr.mxu0 0.0
    %518 = vmatpush2.msra.mxu0 0.0
    %519 = vmatprep.subr.mxu0 0.0
    %520 = vmatpush2.msra.mxu0 0.0
    %521 = vmatprep.subr.mxu0 0.0
    %522 = vmatpush2.msra.mxu0 0.0
    %523 = vmatprep.subr.mxu0 0.0
    %524 = vmatpush2.msra.mxu0 0.0
    %525 = vmatprep.subr.mxu0 0.0
    %526 = vmatpush2.msra.mxu0 0.0
    %527 = vmatprep.subr.mxu0 0.0
    %528 = vmatpush2.msra.mxu0 0.0
    %529 = vmatprep.subr.mxu0 0.0
    %530 = vmatpush2.msra.mxu0 0.0
    %531 = vmatprep.subr.mxu0 0.0
    %532 = vmatpush2.msra.mxu0 0.0
    %533 = vmatprep.subr.mxu0 0.0
    %534 = vmatpush2.msra.mxu0 0.0
    %535 = vmatprep.subr.mxu0 0.0
    %536 = vmatpush2.msra.mxu0 0.0
    %537 = vmatprep.subr.mxu0 0.0
    %538 = vmatpush2.msra.mxu0 0.0
    %539 = vmatprep.subr.mxu0 0.0
    %540 = vmatpush2.msra.mxu0 0.0
    %541 = vmatprep.subr.mxu0 0.0
    %542 = vmatpush2.msra.mxu0 0.0
    %543 = vmatprep.mubr.f32.mxu0 0.0
    %544 = vmatmul.mubr.f32.gmra.mxu0 %v477
    %v545 = vpop.f32.mrf.mxu0
    %v546 = vadd.f32 0.0, %v545
    %v547 = vpop.f32.mrf.mxu0
    %548 = vdwg.mxu0
    %v550 = vrot.slane %v546, 5
    %v552 = vadd.f32 %v170, %v550
    %v553 = vtanh.pop %v552
    %v554 = vadd.f32 %v553, 1.0
    %v555 = vmul.f32 %v554, 0.5
    %v557 = vrot.slane %v466, 7
    %v559 = vmul.f32 %v555, %v557
    %561 = vrot.lane.b32.xlu0 %v553, 64
    %v562 = vpop.permute.xlu0 %561
    %v564 = vmul.f32 %v555, %v562
    %566 = vrot.lane.b32.xlu0 %v564, 32
    %v567 = vpop.permute.xlu0 %566
    %v569 = vadd.f32 %v559, %v567
    %v570 = vtanh.pop %v569
    %572 = vrot.lane.b32.xlu0 %v570, 64
    %v573 = vpop.permute.xlu0 %572
    %v575 = vmul.f32 %v555, %v573
    %v577 = vrot.slane %v575, 3
    %578 = vrot.lane.b32.xlu0 %v577, 32
    %v579 = vpop.permute.xlu0 %578
    %v580 = vsel %vm173, %v579, 0
    %582 = vmatprep.subr.mxu0 0.0
    %583 = vmatpush1.msra.mxu0 0.0
    %584 = vmatprep.subr.mxu0 0.0
    %585 = vmatpush1.msra.mxu0 0.0
    %586 = vmatprep.subr.mxu0 0.0
    %587 = vmatpush1.msra.mxu0 0.0
    %588 = vmatprep.subr.mxu0 0.0
    %589 = vmatpush1.msra.mxu0 0.0
    %590 = vmatprep.subr.mxu0 0.0
    %591 = vmatpush1.msra.mxu0 0.0
    %592 = vmatprep.subr.mxu0 0.0
    %593 = vmatpush1.msra.mxu0 0.0
    %594 = vmatprep.subr.mxu0 0.0
    %595 = vmatpush1.msra.mxu0 0.0
    %596 = vmatprep.subr.mxu0 0.0
    %597 = vmatpush1.msra.mxu0 0.0
    %598 = vmatprep.subr.mxu0 0.0
    %599 = vmatpush1.msra.mxu0 0.0
    %600 = vmatprep.subr.mxu0 0.0
    %601 = vmatpush1.msra.mxu0 0.0
    %602 = vmatprep.subr.mxu0 0.0
    %603 = vmatpush1.msra.mxu0 0.0
    %604 = vmatprep.subr.mxu0 0.0
    %605 = vmatpush1.msra.mxu0 0.0
    %606 = vmatprep.subr.mxu0 0.0
    %607 = vmatpush1.msra.mxu0 %v43
    %608 = vmatprep.subr.mxu0 0.0
    %609 = vmatpush1.msra.mxu0 %v42
    %610 = vmatprep.subr.mxu0 0.0
    %611 = vmatpush1.msra.mxu0 %v41
    %612 = vmatprep.subr.mxu0 0.0
    %613 = vmatpush1.msra.mxu0 %v40
    %614 = vmatprep.subr.mxu0 0.0
    %615 = vmatpush2.msra.mxu0 0.0
    %616 = vmatprep.subr.mxu0 0.0
    %617 = vmatpush2.msra.mxu0 0.0
    %618 = vmatprep.subr.mxu0 0.0
    %619 = vmatpush2.msra.mxu0 0.0
    %620 = vmatprep.subr.mxu0 0.0
    %621 = vmatpush2.msra.mxu0 0.0
    %622 = vmatprep.subr.mxu0 0.0
    %623 = vmatpush2.msra.mxu0 0.0
    %624 = vmatprep.subr.mxu0 0.0
    %625 = vmatpush2.msra.mxu0 0.0
    %626 = vmatprep.subr.mxu0 0.0
    %627 = vmatpush2.msra.mxu0 0.0
    %628 = vmatprep.subr.mxu0 0.0
    %629 = vmatpush2.msra.mxu0 0.0
    %630 = vmatprep.subr.mxu0 0.0
    %631 = vmatpush2.msra.mxu0 0.0
    %632 = vmatprep.subr.mxu0 0.0
    %633 = vmatpush2.msra.mxu0 0.0
    %634 = vmatprep.subr.mxu0 0.0
    %635 = vmatpush2.msra.mxu0 0.0
    %636 = vmatprep.subr.mxu0 0.0
    %637 = vmatpush2.msra.mxu0 0.0
    %638 = vmatprep.subr.mxu0 0.0
    %639 = vmatpush2.msra.mxu0 0.0
    %640 = vmatprep.subr.mxu0 0.0
    %641 = vmatpush2.msra.mxu0 0.0
    %642 = vmatprep.subr.mxu0 0.0
    %643 = vmatpush2.msra.mxu0 0.0
    %644 = vmatprep.subr.mxu0 0.0
    %645 = vmatpush2.msra.mxu0 0.0
    %646 = vmatprep.mubr.f32.mxu0 0.0
    %647 = vmatmul.mubr.f32.gmra.mxu0 %v580
    %v648 = vpop.f32.mrf.mxu0
    %v649 = vadd.f32 0.0, %v648
    %v650 = vpop.f32.mrf.mxu0
    %651 = vdwg.mxu0
    %v653 = vrot.slane %v649, 4
    %v655 = vadd.f32 %v170, %v653
    %v656 = vtanh.pop %v655
    %v657 = vadd.f32 %v656, 1.0
    %v658 = vmul.f32 %v657, 0.5
    %v660 = vrot.slane %v569, 7
    %v662 = vmul.f32 %v658, %v660
    %664 = vrot.lane.b32.xlu0 %v656, 64
    %v665 = vpop.permute.xlu0 %664
    %v667 = vmul.f32 %v658, %v665
    %669 = vrot.lane.b32.xlu0 %v667, 32
    %v670 = vpop.permute.xlu0 %669
    %v672 = vadd.f32 %v662, %v670
    %v673 = vtanh.pop %v672
    %675 = vrot.lane.b32.xlu0 %v673, 64
    %v676 = vpop.permute.xlu0 %675
    %v678 = vmul.f32 %v658, %v676
    %v680 = vrot.slane %v678, 4
    %681 = vrot.lane.b32.xlu0 %v680, 32
    %v682 = vpop.permute.xlu0 %681
    %v683 = vsel %vm173, %v682, 0
    %685 = vmatprep.subr.mxu0 0.0
    %686 = vmatpush1.msra.mxu0 0.0
    %687 = vmatprep.subr.mxu0 0.0
    %688 = vmatpush1.msra.mxu0 0.0
    %689 = vmatprep.subr.mxu0 0.0
    %690 = vmatpush1.msra.mxu0 0.0
    %691 = vmatprep.subr.mxu0 0.0
    %692 = vmatpush1.msra.mxu0 0.0
    %693 = vmatprep.subr.mxu0 0.0
    %694 = vmatpush1.msra.mxu0 0.0
    %695 = vmatprep.subr.mxu0 0.0
    %696 = vmatpush1.msra.mxu0 0.0
    %697 = vmatprep.subr.mxu0 0.0
    %698 = vmatpush1.msra.mxu0 0.0
    %699 = vmatprep.subr.mxu0 0.0
    %700 = vmatpush1.msra.mxu0 0.0
    %701 = vmatprep.subr.mxu0 0.0
    %702 = vmatpush1.msra.mxu0 0.0
    %703 = vmatprep.subr.mxu0 0.0
    %704 = vmatpush1.msra.mxu0 0.0
    %705 = vmatprep.subr.mxu0 0.0
    %706 = vmatpush1.msra.mxu0 0.0
    %707 = vmatprep.subr.mxu0 0.0
    %708 = vmatpush1.msra.mxu0 0.0
    %709 = vmatprep.subr.mxu0 0.0
    %710 = vmatpush1.msra.mxu0 %v43
    %711 = vmatprep.subr.mxu0 0.0
    %712 = vmatpush1.msra.mxu0 %v42
    %713 = vmatprep.subr.mxu0 0.0
    %714 = vmatpush1.msra.mxu0 %v41
    %715 = vmatprep.subr.mxu0 0.0
    %716 = vmatpush1.msra.mxu0 %v40
    %717 = vmatprep.subr.mxu0 0.0
    %718 = vmatpush2.msra.mxu0 0.0
    %719 = vmatprep.subr.mxu0 0.0
    %720 = vmatpush2.msra.mxu0 0.0
    %721 = vmatprep.subr.mxu0 0.0
    %722 = vmatpush2.msra.mxu0 0.0
    %723 = vmatprep.subr.mxu0 0.0
    %724 = vmatpush2.msra.mxu0 0.0
    %725 = vmatprep.subr.mxu0 0.0
    %726 = vmatpush2.msra.mxu0 0.0
    %727 = vmatprep.subr.mxu0 0.0
    %728 = vmatpush2.msra.mxu0 0.0
    %729 = vmatprep.subr.mxu0 0.0
    %730 = vmatpush2.msra.mxu0 0.0
    %731 = vmatprep.subr.mxu0 0.0
    %732 = vmatpush2.msra.mxu0 0.0
    %733 = vmatprep.subr.mxu0 0.0
    %734 = vmatpush2.msra.mxu0 0.0
    %735 = vmatprep.subr.mxu0 0.0
    %736 = vmatpush2.msra.mxu0 0.0
    %737 = vmatprep.subr.mxu0 0.0
    %738 = vmatpush2.msra.mxu0 0.0
    %739 = vmatprep.subr.mxu0 0.0
    %740 = vmatpush2.msra.mxu0 0.0
    %741 = vmatprep.subr.mxu0 0.0
    %742 = vmatpush2.msra.mxu0 0.0
    %743 = vmatprep.subr.mxu0 0.0
    %744 = vmatpush2.msra.mxu0 0.0
    %745 = vmatprep.subr.mxu0 0.0
    %746 = vmatpush2.msra.mxu0 0.0
    %747 = vmatprep.subr.mxu0 0.0
    %748 = vmatpush2.msra.mxu0 0.0
    %749 = vmatprep.mubr.f32.mxu0 0.0
    %750 = vmatmul.mubr.f32.gmra.mxu0 %v683
    %v751 = vpop.f32.mrf.mxu0
    %v752 = vadd.f32 0.0, %v751
    %v753 = vpop.f32.mrf.mxu0
    %754 = vdwg.mxu0
    %v756 = vrot.slane %v752, 3
    %v758 = vadd.f32 %v170, %v756
    %v759 = vtanh.pop %v758
    %v760 = vadd.f32 %v759, 1.0
    %v761 = vmul.f32 %v760, 0.5
    %v763 = vrot.slane %v672, 7
    %v765 = vmul.f32 %v761, %v763
    %767 = vrot.lane.b32.xlu0 %v759, 64
    %v768 = vpop.permute.xlu0 %767
    %v770 = vmul.f32 %v761, %v768
    %772 = vrot.lane.b32.xlu0 %v770, 32
    %v773 = vpop.permute.xlu0 %772
    %v775 = vadd.f32 %v765, %v773
    %v776 = vtanh.pop %v775
    %778 = vrot.lane.b32.xlu0 %v776, 64
    %v779 = vpop.permute.xlu0 %778
    %v781 = vmul.f32 %v761, %v779
    %v783 = vrot.slane %v781, 5
    %784 = vrot.lane.b32.xlu0 %v783, 32
    %v785 = vpop.permute.xlu0 %784
    %v786 = vsel %vm173, %v785, 0
    %788 = vmatprep.subr.mxu0 0.0
    %789 = vmatpush1.msra.mxu0 0.0
    %790 = vmatprep.subr.mxu0 0.0
    %791 = vmatpush1.msra.mxu0 0.0
    %792 = vmatprep.subr.mxu0 0.0
    %793 = vmatpush1.msra.mxu0 0.0
    %794 = vmatprep.subr.mxu0 0.0
    %795 = vmatpush1.msra.mxu0 0.0
    %796 = vmatprep.subr.mxu0 0.0
    %797 = vmatpush1.msra.mxu0 0.0
    %798 = vmatprep.subr.mxu0 0.0
    %799 = vmatpush1.msra.mxu0 0.0
    %800 = vmatprep.subr.mxu0 0.0
    %801 = vmatpush1.msra.mxu0 0.0
    %802 = vmatprep.subr.mxu0 0.0
    %803 = vmatpush1.msra.mxu0 0.0
    %804 = vmatprep.subr.mxu0 0.0
    %805 = vmatpush1.msra.mxu0 0.0
    %806 = vmatprep.subr.mxu0 0.0
    %807 = vmatpush1.msra.mxu0 0.0
    %808 = vmatprep.subr.mxu0 0.0
    %809 = vmatpush1.msra.mxu0 0.0
    %810 = vmatprep.subr.mxu0 0.0
    %811 = vmatpush1.msra.mxu0 0.0
    %812 = vmatprep.subr.mxu0 0.0
    %813 = vmatpush1.msra.mxu0 %v43
    %814 = vmatprep.subr.mxu0 0.0
    %815 = vmatpush1.msra.mxu0 %v42
    %816 = vmatprep.subr.mxu0 0.0
    %817 = vmatpush1.msra.mxu0 %v41
    %818 = vmatprep.subr.mxu0 0.0
    %819 = vmatpush1.msra.mxu0 %v40
    %820 = vmatprep.subr.mxu0 0.0
    %821 = vmatpush2.msra.mxu0 0.0
    %822 = vmatprep.subr.mxu0 0.0
    %823 = vmatpush2.msra.mxu0 0.0
    %824 = vmatprep.subr.mxu0 0.0
    %825 = vmatpush2.msra.mxu0 0.0
    %826 = vmatprep.subr.mxu0 0.0
    %827 = vmatpush2.msra.mxu0 0.0
    %828 = vmatprep.subr.mxu0 0.0
    %829 = vmatpush2.msra.mxu0 0.0
    %830 = vmatprep.subr.mxu0 0.0
    %831 = vmatpush2.msra.mxu0 0.0
    %832 = vmatprep.subr.mxu0 0.0
    %833 = vmatpush2.msra.mxu0 0.0
    %834 = vmatprep.subr.mxu0 0.0
    %835 = vmatpush2.msra.mxu0 0.0
    %836 = vmatprep.subr.mxu0 0.0
    %837 = vmatpush2.msra.mxu0 0.0
    %838 = vmatprep.subr.mxu0 0.0
    %839 = vmatpush2.msra.mxu0 0.0
    %840 = vmatprep.subr.mxu0 0.0
    %841 = vmatpush2.msra.mxu0 0.0
    %842 = vmatprep.subr.mxu0 0.0
    %843 = vmatpush2.msra.mxu0 0.0
    %844 = vmatprep.subr.mxu0 0.0
    %845 = vmatpush2.msra.mxu0 0.0
    %846 = vmatprep.subr.mxu0 0.0
    %847 = vmatpush2.msra.mxu0 0.0
    %848 = vmatprep.subr.mxu0 0.0
    %849 = vmatpush2.msra.mxu0 0.0
    %850 = vmatprep.subr.mxu0 0.0
    %851 = vmatpush2.msra.mxu0 0.0
    %852 = vmatprep.mubr.f32.mxu0 0.0
    %853 = vmatmul.mubr.f32.gmra.mxu0 %v786
    %v854 = vpop.f32.mrf.mxu0
    %v855 = vadd.f32 0.0, %v854
    %v856 = vpop.f32.mrf.mxu0
    %857 = vdwg.mxu0
    %v859 = vrot.slane %v855, 2
    %v861 = vadd.f32 %v170, %v859
    %v862 = vtanh.pop %v861
    %v863 = vadd.f32 %v862, 1.0
    %v864 = vmul.f32 %v863, 0.5
    %v866 = vrot.slane %v775, 7
    %v868 = vmul.f32 %v864, %v866
    %870 = vrot.lane.b32.xlu0 %v862, 64
    %v871 = vpop.permute.xlu0 %870
    %v873 = vmul.f32 %v864, %v871
    %875 = vrot.lane.b32.xlu0 %v873, 32
    %v876 = vpop.permute.xlu0 %875
    %v878 = vadd.f32 %v868, %v876
    %v879 = vtanh.pop %v878
    %881 = vrot.lane.b32.xlu0 %v879, 64
    %v882 = vpop.permute.xlu0 %881
    %v884 = vmul.f32 %v864, %v882
    %v886 = vrot.slane %v884, 6
    %887 = vrot.lane.b32.xlu0 %v886, 32
    %v888 = vpop.permute.xlu0 %887
    %v889 = vsel %vm173, %v888, 0
    %891 = vmatprep.subr.mxu0 0.0
    %892 = vmatpush1.msra.mxu0 0.0
    %893 = vmatprep.subr.mxu0 0.0
    %894 = vmatpush1.msra.mxu0 0.0
    %895 = vmatprep.subr.mxu0 0.0
    %896 = vmatpush1.msra.mxu0 0.0
    %897 = vmatprep.subr.mxu0 0.0
    %898 = vmatpush1.msra.mxu0 0.0
    %899 = vmatprep.subr.mxu0 0.0
    %900 = vmatpush1.msra.mxu0 0.0
    %901 = vmatprep.subr.mxu0 0.0
    %902 = vmatpush1.msra.mxu0 0.0
    %903 = vmatprep.subr.mxu0 0.0
    %904 = vmatpush1.msra.mxu0 0.0
    %905 = vmatprep.subr.mxu0 0.0
    %906 = vmatpush1.msra.mxu0 0.0
    %907 = vmatprep.subr.mxu0 0.0
    %908 = vmatpush1.msra.mxu0 0.0
    %909 = vmatprep.subr.mxu0 0.0
    %910 = vmatpush1.msra.mxu0 0.0
    %911 = vmatprep.subr.mxu0 0.0
    %912 = vmatpush1.msra.mxu0 0.0
    %913 = vmatprep.subr.mxu0 0.0
    %914 = vmatpush1.msra.mxu0 0.0
    %915 = vmatprep.subr.mxu0 0.0
    %916 = vmatpush1.msra.mxu0 %v43
    %917 = vmatprep.subr.mxu0 0.0
    %918 = vmatpush1.msra.mxu0 %v42
    %919 = vmatprep.subr.mxu0 0.0
    %920 = vmatpush1.msra.mxu0 %v41
    %921 = vmatprep.subr.mxu0 0.0
    %922 = vmatpush1.msra.mxu0 %v40
    %923 = vmatprep.subr.mxu0 0.0
    %924 = vmatpush2.msra.mxu0 0.0
    %925 = vmatprep.subr.mxu0 0.0
    %926 = vmatpush2.msra.mxu0 0.0
    %927 = vmatprep.subr.mxu0 0.0
    %928 = vmatpush2.msra.mxu0 0.0
    %929 = vmatprep.subr.mxu0 0.0
    %930 = vmatpush2.msra.mxu0 0.0
    %931 = vmatprep.subr.mxu0 0.0
    %932 = vmatpush2.msra.mxu0 0.0
    %933 = vmatprep.subr.mxu0 0.0
    %934 = vmatpush2.msra.mxu0 0.0
    %935 = vmatprep.subr.mxu0 0.0
    %936 = vmatpush2.msra.mxu0 0.0
    %937 = vmatprep.subr.mxu0 0.0
    %938 = vmatpush2.msra.mxu0 0.0
    %939 = vmatprep.subr.mxu0 0.0
    %940 = vmatpush2.msra.mxu0 0.0
    %941 = vmatprep.subr.mxu0 0.0
    %942 = vmatpush2.msra.mxu0 0.0
    %943 = vmatprep.subr.mxu0 0.0
    %944 = vmatpush2.msra.mxu0 0.0
    %945 = vmatprep.subr.mxu0 0.0
    %946 = vmatpush2.msra.mxu0 0.0
    %947 = vmatprep.subr.mxu0 0.0
    %948 = vmatpush2.msra.mxu0 0.0
    %949 = vmatprep.subr.mxu0 0.0
    %950 = vmatpush2.msra.mxu0 0.0
    %951 = vmatprep.subr.mxu0 0.0
    %952 = vmatpush2.msra.mxu0 0.0
    %953 = vmatprep.subr.mxu0 0.0
    %954 = vmatpush2.msra.mxu0 0.0
    %955 = vmatprep.mubr.f32.mxu0 0.0
    %956 = vmatmul.mubr.f32.gmra.mxu0 %v889
    %v957 = vpop.f32.mrf.mxu0
    %v958 = vadd.f32 0.0, %v957
    %v959 = vpop.f32.mrf.mxu0
    %960 = vdwg.mxu0
    %v962 = vrot.slane %v958, 1
    %v964 = vadd.f32 %v170, %v962
    %v965 = vtanh.pop %v964
    %v966 = vadd.f32 %v965, 1.0
    %v967 = vmul.f32 %v966, 0.5
    %v969 = vrot.slane %v878, 7
    %v971 = vmul.f32 %v967, %v969
    %973 = vrot.lane.b32.xlu0 %v965, 64
    %v974 = vpop.permute.xlu0 %973
    %v976 = vmul.f32 %v967, %v974
    %978 = vrot.lane.b32.xlu0 %v976, 32
    %v979 = vpop.permute.xlu0 %978
    %v981 = vadd.f32 %v971, %v979
    %v982 = vtanh.pop %v981
    %984 = vrot.lane.b32.xlu0 %v982, 64
    %v985 = vpop.permute.xlu0 %984
    %v987 = vmul.f32 %v967, %v985
    %v988 = vsel %vm81, %v267, %v369
    %v989 = vsel %vm83, %v988, %v472
    %v990 = vsel %vm85, %v989, %v575
    %v991 = vsel %vm87, %v990, %v678
    %v992 = vsel %vm89, %v991, %v781
    %v993 = vsel %vm91, %v992, %v884
    %v994 = vsel %vm93, %v993, %v987
    %v995 = vld [vmem:[#allocation2 + $0x30] sm:$0xff]
    %v996 = vld [vmem:[#allocation2 + $0x38] sm:$0xff]
    %v997 = vld [vmem:[#allocation2 + $0x40] sm:$0xff]
    %v998 = vld [vmem:[#allocation2 + $0x48] sm:$0xff]
    %v999 = vld [vmem:[#allocation2 + $0x50] sm:$0xff]
    %v1000 = vld [vmem:[#allocation2 + $0x58] sm:$0xff]
    %v1001 = vld [vmem:[#allocation2 + $0x60] sm:$0xff]
    %v1002 = vld [vmem:[#allocation2 + $0x68] sm:$0xff]
    %v1003 = vld [vmem:[#allocation2 + $0x70] sm:$0xff]
    %v1004 = vld [vmem:[#allocation2 + $0x78] sm:$0xff]
    %v1005 = vld [vmem:[#allocation2 + $0x80] sm:$0x1]
    %1007 = vrot.lane.b32.xlu0 %v994, 32
    %v1008 = vpop.permute.xlu0 %1007
    %v1010 = vsel %vm173, %v995, 0
    %v1013 = vsel %vm173, %v996, 0
    %v1015 = vsel %vm173, %v1008, 0
    %1017 = vmatprep.subr.mxu0 0.0
    %1018 = vmatpush1.xpose.msra.mxu0 0.0
    %1019 = vmatprep.subr.mxu0 0.0
    %1020 = vmatpush1.xpose.msra.mxu0 0.0
    %1021 = vmatprep.subr.mxu0 0.0
    %1022 = vmatpush1.xpose.msra.mxu0 0.0
    %1023 = vmatprep.subr.mxu0 0.0
    %1024 = vmatpush1.xpose.msra.mxu0 0.0
    %1025 = vmatprep.subr.mxu0 0.0
    %1026 = vmatpush1.xpose.msra.mxu0 0.0
    %1027 = vmatprep.subr.mxu0 0.0
    %1028 = vmatpush1.xpose.msra.mxu0 0.0
    %1029 = vmatprep.subr.mxu0 0.0
    %1030 = vmatpush1.xpose.msra.mxu0 0.0
    %1031 = vmatprep.subr.mxu0 0.0
    %1032 = vmatpush1.xpose.msra.mxu0 0.0
    %1033 = vmatprep.subr.mxu0 0.0
    %1034 = vmatpush1.xpose.msra.mxu0 0.0
    %1035 = vmatprep.subr.mxu0 0.0
    %1036 = vmatpush1.xpose.msra.mxu0 0.0
    %1037 = vmatprep.subr.mxu0 0.0
    %1038 = vmatpush1.xpose.msra.mxu0 0.0
    %1039 = vmatprep.subr.mxu0 0.0
    %1040 = vmatpush1.xpose.msra.mxu0 0.0
    %1041 = vmatprep.subr.mxu0 0.0
    %1042 = vmatpush1.xpose.msra.mxu0 0.0
    %1043 = vmatprep.subr.mxu0 0.0
    %1044 = vmatpush1.xpose.msra.mxu0 0.0
    %1045 = vmatprep.subr.mxu0 0.0
    %1046 = vmatpush1.xpose.msra.mxu0 0.0
    %1047 = vmatprep.subr.mxu0 0.0
    %1048 = vmatpush1.xpose.msra.mxu0 %v1015
    %1049 = vmatprep.subr.mxu0 0.0
    %1050 = vmatpush2.xpose.msra.mxu0 0.0
    %1051 = vmatprep.subr.mxu0 0.0
    %1052 = vmatpush2.xpose.msra.mxu0 0.0
    %1053 = vmatprep.subr.mxu0 0.0
    %1054 = vmatpush2.xpose.msra.mxu0 0.0
    %1055 = vmatprep.subr.mxu0 0.0
    %1056 = vmatpush2.xpose.msra.mxu0 0.0
    %1057 = vmatprep.subr.mxu0 0.0
    %1058 = vmatpush2.xpose.msra.mxu0 0.0
    %1059 = vmatprep.subr.mxu0 0.0
    %1060 = vmatpush2.xpose.msra.mxu0 0.0
    %1061 = vmatprep.subr.mxu0 0.0
    %1062 = vmatpush2.xpose.msra.mxu0 0.0
    %1063 = vmatprep.subr.mxu0 0.0
    %1064 = vmatpush2.xpose.msra.mxu0 0.0
    %1065 = vmatprep.subr.mxu0 0.0
    %1066 = vmatpush2.xpose.msra.mxu0 0.0
    %1067 = vmatprep.subr.mxu0 0.0
    %1068 = vmatpush2.xpose.msra.mxu0 0.0
    %1069 = vmatprep.subr.mxu0 0.0
    %1070 = vmatpush2.xpose.msra.mxu0 0.0
    %1071 = vmatprep.subr.mxu0 0.0
    %1072 = vmatpush2.xpose.msra.mxu0 0.0
    %1073 = vmatprep.subr.mxu0 0.0
    %1074 = vmatpush2.xpose.msra.mxu0 0.0
    %1075 = vmatprep.subr.mxu0 0.0
    %1076 = vmatpush2.xpose.msra.mxu0 0.0
    %1077 = vmatprep.subr.mxu0 0.0
    %1078 = vmatpush2.xpose.msra.mxu0 0.0
    %1079 = vmatprep.subr.mxu0 0.0
    %1080 = vmatpush2.xpose.msra.mxu0 0.0
    %1081 = vmatprep.mubr.f32.mxu0 0.0
    %1082 = vmatmul.mubr.f32.gmra.mxu0 %v1010
    %v1083 = vpop.f32.mrf.mxu0
    %v1084 = vadd.f32 0.0, %v1083
    %v1085 = vpop.f32.mrf.mxu0
    %1086 = vmatprep.mubr.f32.mxu0 0.0
    %1087 = vmatmul.mubr.f32.gmra.mxu0 %v1013
    %v1088 = vpop.f32.mrf.mxu0
    %v1089 = vadd.f32 0.0, %v1088
    %v1090 = vpop.f32.mrf.mxu0
    %1091 = vdwg.mxu0
    %v1092 = vtanh.pop %v1084
    %v1093 = vtanh.pop %v1089
    %vm1094 = vcmask 130048
    %v1096 = vsel %vm1094, %v997, 0
    %v1099 = vsel %vm1094, %v998, 0
    %v1102 = vsel %vm1094, %v999, 0
    %v1105 = vsel %vm1094, %v1000, 0
    %1107 = vmatprep.subr.mxu0 0.0
    %1108 = vmatpush1.msra.mxu0 0.0
    %1109 = vmatprep.subr.mxu0 0.0
    %1110 = vmatpush1.msra.mxu0 0.0
    %1111 = vmatprep.subr.mxu0 0.0
    %1112 = vmatpush1.msra.mxu0 0.0
    %1113 = vmatprep.subr.mxu0 0.0
    %1114 = vmatpush1.msra.mxu0 0.0
    %1115 = vmatprep.subr.mxu0 0.0
    %1116 = vmatpush1.msra.mxu0 0.0
    %1117 = vmatprep.subr.mxu0 0.0
    %1118 = vmatpush1.msra.mxu0 0.0
    %1119 = vmatprep.subr.mxu0 0.0
    %1120 = vmatpush1.msra.mxu0 0.0
    %1121 = vmatprep.subr.mxu0 0.0
    %1122 = vmatpush1.msra.mxu0 0.0
    %1123 = vmatprep.subr.mxu0 0.0
    %1124 = vmatpush1.msra.mxu0 0.0
    %1125 = vmatprep.subr.mxu0 0.0
    %1126 = vmatpush1.msra.mxu0 0.0
    %1127 = vmatprep.subr.mxu0 0.0
    %1128 = vmatpush1.msra.mxu0 0.0
    %1129 = vmatprep.subr.mxu0 0.0
    %1130 = vmatpush1.msra.mxu0 0.0
    %1131 = vmatprep.subr.mxu0 0.0
    %1132 = vmatpush1.msra.mxu0 0.0
    %1133 = vmatprep.subr.mxu0 0.0
    %1134 = vmatpush1.msra.mxu0 0.0
    %1135 = vmatprep.subr.mxu0 0.0
    %1136 = vmatpush1.msra.mxu0 %v1093
    %1137 = vmatprep.subr.mxu0 0.0
    %1138 = vmatpush1.msra.mxu0 %v1092
    %1139 = vmatprep.subr.mxu0 0.0
    %1140 = vmatpush2.msra.mxu0 0.0
    %1141 = vmatprep.subr.mxu0 0.0
    %1142 = vmatpush2.msra.mxu0 0.0
    %1143 = vmatprep.subr.mxu0 0.0
    %1144 = vmatpush2.msra.mxu0 0.0
    %1145 = vmatprep.subr.mxu0 0.0
    %1146 = vmatpush2.msra.mxu0 0.0
    %1147 = vmatprep.subr.mxu0 0.0
    %1148 = vmatpush2.msra.mxu0 0.0
    %1149 = vmatprep.subr.mxu0 0.0
    %1150 = vmatpush2.msra.mxu0 0.0
    %1151 = vmatprep.subr.mxu0 0.0
    %1152 = vmatpush2.msra.mxu0 0.0
    %1153 = vmatprep.subr.mxu0 0.0
    %1154 = vmatpush2.msra.mxu0 0.0
    %1155 = vmatprep.subr.mxu0 0.0
    %1156 = vmatpush2.msra.mxu0 0.0
    %1157 = vmatprep.subr.mxu0 0.0
    %1158 = vmatpush2.msra.mxu0 0.0
    %1159 = vmatprep.subr.mxu0 0.0
    %1160 = vmatpush2.msra.mxu0 0.0
    %1161 = vmatprep.subr.mxu0 0.0
    %1162 = vmatpush2.msra.mxu0 0.0
    %1163 = vmatprep.subr.mxu0 0.0
    %1164 = vmatpush2.msra.mxu0 0.0
    %1165 = vmatprep.subr.mxu0 0.0
    %1166 = vmatpush2.msra.mxu0 0.0
    %1167 = vmatprep.subr.mxu0 0.0
    %1168 = vmatpush2.msra.mxu0 0.0
    %1169 = vmatprep.subr.mxu0 0.0
    %1170 = vmatpush2.msra.mxu0 0.0
    %1171 = vmatprep.mubr.f32.mxu0 0.0
    %1172 = vmatmul.mubr.f32.gmra.mxu0 %v1096
    %v1173 = vpop.f32.mrf.mxu0
    %v1174 = vadd.f32 0.0, %v1173
    %v1175 = vpop.f32.mrf.mxu0
    %1176 = vmatprep.mubr.f32.mxu0 0.0
    %1177 = vmatmul.mubr.f32.gmra.mxu0 %v1099
    %v1178 = vpop.f32.mrf.mxu0
    %v1179 = vadd.f32 0.0, %v1178
    %v1180 = vpop.f32.mrf.mxu0
    %1181 = vmatprep.mubr.f32.mxu0 0.0
    %1182 = vmatmul.mubr.f32.gmra.mxu0 %v1102
    %v1183 = vpop.f32.mrf.mxu0
    %v1184 = vadd.f32 0.0, %v1183
    %v1185 = vpop.f32.mrf.mxu0
    %1186 = vmatprep.mubr.f32.mxu0 0.0
    %1187 = vmatmul.mubr.f32.gmra.mxu0 %v1105
    %v1188 = vpop.f32.mrf.mxu0
    %v1189 = vadd.f32 0.0, %v1188
    %v1190 = vpop.f32.mrf.mxu0
    %1191 = vdwg.mxu0
    %v1192 = vsel %vm99, %v1174, -inf
    %1193 = vmax.xlane.f32.xlu0 %v1192
    %v1194 = vpop.xlane.xlu0 %1193
    %v1195 = vsel %vm99, %v1179, -inf
    %1196 = vmax.xlane.f32.xlu0 %v1195
    %v1197 = vpop.xlane.xlu0 %1196
    %v1198 = vsel %vm99, %v1184, -inf
    %1199 = vmax.xlane.f32.xlu0 %v1198
    %v1200 = vpop.xlane.xlu0 %1199
    %v1201 = vsel %vm99, %v1189, -inf
    %1202 = vmax.xlane.f32.xlu0 %v1201
    %v1203 = vpop.xlane.xlu0 %1202
    %v1204 = vsub.f32 %v1174, %v1194
    %v1205 = vsub.f32 %v1179, %v1197
    %v1206 = vsub.f32 %v1184, %v1200
    %v1207 = vsub.f32 %v1189, %v1203
    %v1208 = vmul.f32 %v1204, 1.442695
    %v1209 = vpow.pop %v1208
    %v1210 = vmul.f32 %v1205, 1.442695
    %v1211 = vpow.pop %v1210
    %v1212 = vmul.f32 %v1206, 1.442695
    %v1213 = vpow.pop %v1212
    %v1214 = vmul.f32 %v1207, 1.442695
    %v1215 = vpow.pop %v1214
    %v1216 = vsel %vm99, %v1209, 0.0
    %1217 = vadd.xlane.f32.xlu0 %v1216
    %v1218 = vpop.xlane.xlu0 %1217
    %v1219 = vsel %vm99, %v1211, 0.0
    %1220 = vadd.xlane.f32.xlu0 %v1219
    %v1221 = vpop.xlane.xlu0 %1220
    %v1222 = vsel %vm99, %v1213, 0.0
    %1223 = vadd.xlane.f32.xlu0 %v1222
    %v1224 = vpop.xlane.xlu0 %1223
    %v1225 = vsel %vm99, %v1215, 0.0
    %1226 = vadd.xlane.f32.xlu0 %v1225
    %v1227 = vpop.xlane.xlu0 %1226
    %v1228 = vrcp.pop %v1218
    %v1229 = vmul.f32 %v1209, %v1228
    %v1230 = vrcp.pop %v1221
    %v1231 = vmul.f32 %v1211, %v1230
    %v1232 = vrcp.pop %v1224
    %v1233 = vmul.f32 %v1213, %v1232
    %v1234 = vrcp.pop %v1227
    %v1235 = vmul.f32 %v1215, %v1234
    %v1238 = vsel %vm99, %v1229, 0
    %v1241 = vsel %vm99, %v1231, 0
    %v1244 = vsel %vm99, %v1233, 0
    %v1247 = vsel %vm99, %v1235, 0
    %1249 = vmatprep.subr.mxu0 0.0
    %1250 = vmatpush1.msra.mxu0 0.0
    %1251 = vmatprep.subr.mxu0 0.0
    %1252 = vmatpush1.msra.mxu0 0.0
    %1253 = vmatprep.subr.mxu0 0.0
    %1254 = vmatpush1.msra.mxu0 0.0
    %1255 = vmatprep.subr.mxu0 0.0
    %1256 = vmatpush1.msra.mxu0 0.0
    %1257 = vmatprep.subr.mxu0 0.0
    %1258 = vmatpush1.msra.mxu0 0.0
    %1259 = vmatprep.subr.mxu0 0.0
    %1260 = vmatpush1.msra.mxu0 0.0
    %1261 = vmatprep.subr.mxu0 0.0
    %1262 = vmatpush1.msra.mxu0 0.0
    %1263 = vmatprep.subr.mxu0 0.0
    %1264 = vmatpush1.msra.mxu0 0.0
    %1265 = vmatprep.subr.mxu0 0.0
    %1266 = vmatpush1.msra.mxu0 0.0
    %1267 = vmatprep.subr.mxu0 0.0
    %1268 = vmatpush1.msra.mxu0 0.0
    %1269 = vmatprep.subr.mxu0 0.0
    %1270 = vmatpush1.msra.mxu0 0.0
    %1271 = vmatprep.subr.mxu0 0.0
    %1272 = vmatpush1.msra.mxu0 0.0
    %1273 = vmatprep.subr.mxu0 0.0
    %1274 = vmatpush1.msra.mxu0 0.0
    %1275 = vmatprep.subr.mxu0 0.0
    %1276 = vmatpush1.msra.mxu0 0.0
    %1277 = vmatprep.subr.mxu0 0.0
    %1278 = vmatpush1.msra.mxu0 0.0
    %1279 = vmatprep.subr.mxu0 0.0
    %1280 = vmatpush1.msra.mxu0 %v1008
    %1281 = vmatprep.subr.mxu0 0.0
    %1282 = vmatpush2.msra.mxu0 0.0
    %1283 = vmatprep.subr.mxu0 0.0
    %1284 = vmatpush2.msra.mxu0 0.0
    %1285 = vmatprep.subr.mxu0 0.0
    %1286 = vmatpush2.msra.mxu0 0.0
    %1287 = vmatprep.subr.mxu0 0.0
    %1288 = vmatpush2.msra.mxu0 0.0
    %1289 = vmatprep.subr.mxu0 0.0
    %1290 = vmatpush2.msra.mxu0 0.0
    %1291 = vmatprep.subr.mxu0 0.0
    %1292 = vmatpush2.msra.mxu0 0.0
    %1293 = vmatprep.subr.mxu0 0.0
    %1294 = vmatpush2.msra.mxu0 0.0
    %1295 = vmatprep.subr.mxu0 0.0
    %1296 = vmatpush2.msra.mxu0 0.0
    %1297 = vmatprep.subr.mxu0 0.0
    %1298 = vmatpush2.msra.mxu0 0.0
    %1299 = vmatprep.subr.mxu0 0.0
    %1300 = vmatpush2.msra.mxu0 0.0
    %1301 = vmatprep.subr.mxu0 0.0
    %1302 = vmatpush2.msra.mxu0 0.0
    %1303 = vmatprep.subr.mxu0 0.0
    %1304 = vmatpush2.msra.mxu0 0.0
    %1305 = vmatprep.subr.mxu0 0.0
    %1306 = vmatpush2.msra.mxu0 0.0
    %1307 = vmatprep.subr.mxu0 0.0
    %1308 = vmatpush2.msra.mxu0 0.0
    %1309 = vmatprep.subr.mxu0 0.0
    %1310 = vmatpush2.msra.mxu0 0.0
    %1311 = vmatprep.subr.mxu0 0.0
    %1312 = vmatpush2.msra.mxu0 0.0
    %1313 = vmatprep.mubr.f32.mxu0 0.0
    %1314 = vmatmul.mubr.f32.gmra.mxu0 %v1238
    %v1315 = vpop.f32.mrf.mxu0
    %v1316 = vadd.f32 0.0, %v1315
    %v1317 = vpop.f32.mrf.mxu0
    %1318 = vmatprep.mubr.f32.mxu0 0.0
    %1319 = vmatmul.mubr.f32.gmra.mxu0 %v1241
    %v1320 = vpop.f32.mrf.mxu0
    %v1321 = vadd.f32 0.0, %v1320
    %v1322 = vpop.f32.mrf.mxu0
    %1323 = vmatprep.mubr.f32.mxu0 0.0
    %1324 = vmatmul.mubr.f32.gmra.mxu0 %v1244
    %v1325 = vpop.f32.mrf.mxu0
    %v1326 = vadd.f32 0.0, %v1325
    %v1327 = vpop.f32.mrf.mxu0
    %1328 = vmatprep.mubr.f32.mxu0 0.0
    %1329 = vmatmul.mubr.f32.gmra.mxu0 %v1247
    %v1330 = vpop.f32.mrf.mxu0
    %v1331 = vadd.f32 0.0, %v1330
    %v1332 = vpop.f32.mrf.mxu0
    %1333 = vdwg.mxu0
    %v1334 = vlaneseq
    %v1335 = vshrl.u32 %v1334, 7
    %v1336 = vsub.s32 0, %v1335
    %v1337 = vrot.slane %v1005, %v1336
    %v1339 = vsel %vm173, %v1316, 0
    %v1342 = vsel %vm173, %v1321, 0
    %v1345 = vsel %vm173, %v1326, 0
    %v1348 = vsel %vm173, %v1331, 0
    %1350 = vmatprep.subr.mxu0 0.0
    %1351 = vmatpush1.msra.mxu0 0.0
    %1352 = vmatprep.subr.mxu0 0.0
    %1353 = vmatpush1.msra.mxu0 0.0
    %1354 = vmatprep.subr.mxu0 0.0
    %1355 = vmatpush1.msra.mxu0 0.0
    %1356 = vmatprep.subr.mxu0 0.0
    %1357 = vmatpush1.msra.mxu0 0.0
    %1358 = vmatprep.subr.mxu0 0.0
    %1359 = vmatpush1.msra.mxu0 0.0
    %1360 = vmatprep.subr.mxu0 0.0
    %1361 = vmatpush1.msra.mxu0 0.0
    %1362 = vmatprep.subr.mxu0 0.0
    %1363 = vmatpush1.msra.mxu0 0.0
    %1364 = vmatprep.subr.mxu0 0.0
    %1365 = vmatpush1.msra.mxu0 0.0
    %1366 = vmatprep.subr.mxu0 0.0
    %1367 = vmatpush1.msra.mxu0 0.0
    %1368 = vmatprep.subr.mxu0 0.0
    %1369 = vmatpush1.msra.mxu0 0.0
    %1370 = vmatprep.subr.mxu0 0.0
    %1371 = vmatpush1.msra.mxu0 0.0
    %1372 = vmatprep.subr.mxu0 0.0
    %1373 = vmatpush1.msra.mxu0 0.0
    %1374 = vmatprep.subr.mxu0 0.0
    %1375 = vmatpush1.msra.mxu0 %v1004
    %1376 = vmatprep.subr.mxu0 0.0
    %1377 = vmatpush1.msra.mxu0 %v1003
    %1378 = vmatprep.subr.mxu0 0.0
    %1379 = vmatpush1.msra.mxu0 %v1002
    %1380 = vmatprep.subr.mxu0 0.0
    %1381 = vmatpush1.msra.mxu0 %v1001
    %1382 = vmatprep.subr.mxu0 0.0
    %1383 = vmatpush2.msra.mxu0 0.0
    %1384 = vmatprep.subr.mxu0 0.0
    %1385 = vmatpush2.msra.mxu0 0.0
    %1386 = vmatprep.subr.mxu0 0.0
    %1387 = vmatpush2.msra.mxu0 0.0
    %1388 = vmatprep.subr.mxu0 0.0
    %1389 = vmatpush2.msra.mxu0 0.0
    %1390 = vmatprep.subr.mxu0 0.0
    %1391 = vmatpush2.msra.mxu0 0.0
    %1392 = vmatprep.subr.mxu0 0.0
    %1393 = vmatpush2.msra.mxu0 0.0
    %1394 = vmatprep.subr.mxu0 0.0
    %1395 = vmatpush2.msra.mxu0 0.0
    %1396 = vmatprep.subr.mxu0 0.0
    %1397 = vmatpush2.msra.mxu0 0.0
    %1398 = vmatprep.subr.mxu0 0.0
    %1399 = vmatpush2.msra.mxu0 0.0
    %1400 = vmatprep.subr.mxu0 0.0
    %1401 = vmatpush2.msra.mxu0 0.0
    %1402 = vmatprep.subr.mxu0 0.0
    %1403 = vmatpush2.msra.mxu0 0.0
    %1404 = vmatprep.subr.mxu0 0.0
    %1405 = vmatpush2.msra.mxu0 0.0
    %1406 = vmatprep.subr.mxu0 0.0
    %1407 = vmatpush2.msra.mxu0 0.0
    %1408 = vmatprep.subr.mxu0 0.0
    %1409 = vmatpush2.msra.mxu0 0.0
    %1410 = vmatprep.subr.mxu0 0.0
    %1411 = vmatpush2.msra.mxu0 0.0
    %1412 = vmatprep.subr.mxu0 0.0
    %1413 = vmatpush2.msra.mxu0 0.0
    %1414 = vmatprep.mubr.f32.mxu0 0.0
    %1415 = vmatmul.mubr.f32.gmra.mxu0 %v1339
    %v1416 = vpop.f32.mrf.mxu0
    %v1417 = vadd.f32 %v1337, %v1416
    %v1418 = vpop.f32.mrf.mxu0
    %1419 = vmatprep.mubr.f32.mxu0 0.0
    %1420 = vmatmul.mubr.f32.gmra.mxu0 %v1342
    %v1421 = vpop.f32.mrf.mxu0
    %v1422 = vadd.f32 %v1337, %v1421
    %v1423 = vpop.f32.mrf.mxu0
    %1424 = vmatprep.mubr.f32.mxu0 0.0
    %1425 = vmatmul.mubr.f32.gmra.mxu0 %v1345
    %v1426 = vpop.f32.mrf.mxu0
    %v1427 = vadd.f32 %v1337, %v1426
    %v1428 = vpop.f32.mrf.mxu0
    %1429 = vmatprep.mubr.f32.mxu0 0.0
    %1430 = vmatmul.mubr.f32.gmra.mxu0 %v1348
    %v1431 = vpop.f32.mrf.mxu0
    %v1432 = vadd.f32 %v1337, %v1431
    %v1433 = vpop.f32.mrf.mxu0
    %1434 = vdwg.mxu0
    %vm1435 = vcmask 31744
    %1436 = vst.msk [vmem:[%s2] sm:$0xff] %vm1435, %v1417
    %1437 = vst.msk [vmem:[%s2 + $0x8] sm:$0xff] %vm1435, %v1422
    %1438 = vst.msk [vmem:[%s2 + $0x10] sm:$0xff] %vm1435, %v1427
    %1439 = vst.msk [vmem:[%s2 + $0x18] sm:$0xff] %vm1435, %v1432
    // Predicated region
    $region18: #{forward.1} parent=1 // pred_check
      _
    $region19: #{forward.1} parent=1 // pred_check_branch
      %1441 = sbr.rel (0) target = $region21
    $region20: #{forward.1} parent=1 // pred_region
      _
    $region21: #{forward.1} parent=1 // pred_fallthru
      _
    // Predicated region
    $region22: #{forward.1} parent=1 // pred_check
      _
    $region23: #{forward.1} parent=1 // pred_check_branch
      %1443 = sbr.rel (0) target = $region25
    $region24: #{forward.1} parent=1 // pred_region
      _
    $region25: #{forward.1} parent=1 // pred_fallthru
      _
    %1444 = vsyncpa [#allocation3], 1
    %1445 = vsyncpa [#allocation5], 1

</llo_original>
